<compile_context>
chip_gen: v5e
topology: v5e:2x2
jax: 0.10.0
libtpu: 0.0.40
codegen_flags: <defaults>
</compile_context>

<pallas_src>
import functools

import numpy as np
import jax
import jax.numpy as jnp
from jax.experimental import pallas as pl
from jax.experimental.pallas import tpu as pltpu

_SUB = 8  # sublanes per vreg


def _round_up(v, m):
    return (v + m - 1) // m * m


def _robot_htm_kernel(t_ref, m_ref, x_ref, o_ref, *, n):
    """x_ref: (2n, 8, TL) batch packed on sublanes x lanes.
    m_ref: (n, 12) SMEM scalars with the batch-independent M = Ty@Tx entries.
    o_ref: ((n+1)*12, 8, TL) rows 0..2 of every cumulative transform."""
    t = t_ref[0, 0]                                   # SMEM scalar timestep
    S = x_ref.shape[1]
    L = x_ref.shape[2]

    def dh_rows(j):
        # Only theta is batch dependent -> 2 transcendental streams per joint.
        theta = x_ref[j] * t + x_ref[n + j]           # (S, L)
        cz = jnp.cos(theta)
        sz = jnp.sin(theta)
        m00 = m_ref[j, 0]
        m01 = m_ref[j, 1]
        m02 = m_ref[j, 2]
        m03 = m_ref[j, 3]
        m11 = m_ref[j, 4]
        m12 = m_ref[j, 5]
        m13 = m_ref[j, 6]
        # dh = Tz @ (Ty @ Tx); row 3 == [0,0,0,1] kept implicit.
        r0 = [cz * m00, cz * m01 - sz * m11, cz * m02 - sz * m12,
              cz * m03 - sz * m13]                    # (S, L) planes
        r1 = [sz * m00, sz * m01 + cz * m11, sz * m02 + cz * m12,
              sz * m03 + cz * m13]                    # (S, L) planes
        r2 = [m_ref[j, 7], m_ref[j, 8], m_ref[j, 9], m_ref[j, 10]]  # scalars
        return r0, r1, r2

    def store_joint(slot, cum):
        # Incremental, full-width (8 x L) unmasked stores; constant row 3 is
        # appended by the wrapper, so only 12 rows per joint are written.
        base = slot * 12
        for i in range(3):
            for k in range(4):
                v = cum[i][k]
                o_ref[base + i * 4 + k] = jnp.broadcast_to(v, (S, L)).astype(
                    jnp.float32)

    # joint 0: cum = dh_0 (row 2 stays scalar until it mixes with joint 1)
    r0, r1, r2 = dh_rows(0)
    cum = [list(r0), list(r1), list(r2)]
    store_joint(0, cum)

    # cum_j = cum_{j-1} @ dh_j, exploiting dh row 3 == [0,0,0,1]
    for j in range(1, n):
        d0, d1, d2 = dh_rows(j)
        new = []
        for i in range(3):
            row = []
            for k in range(4):
                v = cum[i][0] * d0[k] + cum[i][1] * d1[k] + cum[i][2] * d2[k]
                if k == 3:
                    v = v + cum[i][3]
                row.append(v)
            new.append(row)
        cum = new
        store_joint(j, cum)

    # N3 duplicates the last cumulative transform: out[:, n] == out[:, n-1]
    store_joint(n, cum)


def robot_htm_forward(x, params, t, *, lane_tile=1024):
    """x: (B, 2n) joint [rates | angles]; params: (5, n) rows
    [alpha, beta, a, b, d]; t: scalar timestep.  Returns (B, n+1, 4, 4)."""
    x = jnp.asarray(x, jnp.float32)
    params = jnp.asarray(params, jnp.float32)
    B = x.shape[0]
    n = params.shape[1]
    assert x.shape[1] == 2 * n
    assert lane_tile % 128 == 0

    # ---- batch-independent DH constants hoisted to the wrapper (SMEM) ----
    alpha, beta, a_tr, b_tr, d_tr = params            # each (n,)
    ca, sa = jnp.cos(alpha), jnp.sin(alpha)
    cb, sb = jnp.cos(beta), jnp.sin(beta)
    m = jnp.stack([
        cb, sb * sa, sb * ca, cb * a_tr,              # M row 0
        ca, -sa, b_tr,                                # M row 1 (m10 == 0)
        -sb, cb * sa, cb * ca, -sb * a_tr + d_tr,     # dh row 2 (incl. +d)
        jnp.zeros_like(a_tr),                         # pad to 12
    ], axis=1)                                        # (n, 12)

    # ---- pack batch onto sublanes x lanes: b -> (s, l), b = s*Lp + l ------
    lanes_needed = int(pl.cdiv(B, _SUB))
    if lanes_needed <= lane_tile:
        TL = _round_up(max(lanes_needed, 1), 128)     # single lane-dense tile
        Lp = TL
    else:
        TL = lane_tile                                # multiple "parallel"
        Lp = _round_up(lanes_needed, TL)              # tiles (v7x: 2 TCs)
    grid = Lp // TL
    B_pad = _SUB * Lp

    x_pad = jnp.zeros((B_pad, 2 * n), jnp.float32).at[:B].set(x)
    x_packed = x_pad.T.reshape(2 * n, _SUB, Lp)       # (2n, 8, Lp)
    t_arr = jnp.full((1, 1), t, jnp.float32)          # runtime SMEM scalar

    rows = (n + 1) * 12
    kernel = functools.partial(_robot_htm_kernel, n=n)
    out_flat = pl.pallas_call(
        kernel,
        out_shape=jax.ShapeDtypeStruct((rows, _SUB, Lp), jnp.float32),
        grid=(grid,),
        in_specs=[
            pl.BlockSpec(memory_space=pltpu.MemorySpace.SMEM),    # t  (1,1)
            pl.BlockSpec(memory_space=pltpu.MemorySpace.SMEM),    # m  (n,12)
            pl.BlockSpec((2 * n, _SUB, TL), lambda i: (0, 0, i)),  # x packed
        ],
        out_specs=pl.BlockSpec((rows, _SUB, TL), lambda i: (0, 0, i)),
        compiler_params=pltpu.CompilerParams(
            dimension_semantics=("parallel",)),
    )(t_arr, m, x_packed)

    # Single repack pass: undo lane-dense layout AND insert the constant
    # bottom row [0,0,0,1] (never written by the kernel).
    top = jnp.transpose(out_flat.reshape(n + 1, 3, 4, _SUB, Lp),
                        (3, 4, 0, 1, 2)).reshape(B_pad, n + 1, 3, 4)[:B]
    bottom = jnp.broadcast_to(
        jnp.array([0.0, 0.0, 0.0, 1.0], jnp.float32), (B, n + 1, 1, 4))
    return jnp.concatenate([top, bottom], axis=2)     # (B, n+1, 4, 4)


def _reference(x, params, t):
    """Pure numpy reference mirroring the PyTorch module semantics."""
    p = np.asarray(x, np.float64)
    pr = np.asarray(params, np.float64)
    B = p.shape[0]
    n = pr.shape[1]
    theta = p[:, :n] * t + p[:, n:]
    alpha, beta, a, b, d = pr
    out = np.zeros((B, n + 1, 4, 4))
    for bi in range(B):
        mats = []
        for j in range(n):
            c, s = np.cos(theta[bi, j]), np.sin(theta[bi, j])
            Tz = np.array([[c, -s, 0, 0], [s, c, 0, 0], [0, 0, 1, d[j]], [0, 0, 0, 1]])
            c, s = np.cos(beta[j]), np.sin(beta[j])
            Ty = np.array([[c, 0, s, 0], [0, 1, 0, b[j]], [-s, 0, c, 0], [0, 0, 0, 1]])
            c, s = np.cos(alpha[j]), np.sin(alpha[j])
            Tx = np.array([[1, 0, 0, a[j]], [0, c, -s, 0], [0, s, c, 0], [0, 0, 0, 1]])
            mats.append(Tz @ Ty @ Tx)
        cum = mats[0]
        out[bi, 0] = cum
        for j in range(1, n):
            cum = cum @ mats[j]
            out[bi, j] = cum
        out[bi, n] = cum
    return out


if __name__ == "__main__":
    B, n, t = 4, 4, 0.01   # batch=4, 4 joints, integration timestep 0.01 (p_t)
    key = jax.random.PRNGKey(0)
    k_x, k_p = jax.random.split(key)
    # input: (B, 2*n) = concat(joint "rate" part, joint angle part)
    x = jax.random.uniform(k_x, (B, 2 * n), jnp.float32, minval=-1.0, maxval=1.0)
    # DHLayer params, (torch.rand(n,1)-0.5)*1 equivalent, rows [alpha, beta, a, b, d]
    params = jax.random.uniform(k_p, (5, n), jnp.float32, minval=-0.5, maxval=0.5)

    out = robot_htm_forward(x, params, t)
    out = jax.block_until_ready(out)

    ref = _reference(np.asarray(x), np.asarray(params), t)
    np.testing.assert_allclose(np.asarray(out), ref, rtol=1e-4, atol=1e-5)
    print("KERNEL_OK")
</pallas_src>

<mosaic_0001>
module attributes {stable_mosaic.version = 11 : i64} {
  func.func @_robot_htm_kernel(%arg0: i32, %arg1: memref<1x1xf32, #tpu.memory_space<smem>>, %arg2: memref<4x12xf32, #tpu.memory_space<smem>>, %arg3: memref<8x8x128xf32, #tpu.memory_space<vmem>>, %arg4: memref<60x8x128xf32, #tpu.memory_space<vmem>>) attributes {dimension_semantics = [#tpu.dimension_semantics<parallel>], iteration_bounds = array<i64: 1>, scalar_prefetch = 0 : i64, scratch_operands = 0 : i64, tpu.core_type = #tpu.core_type<tc>, window_params = [{transform_indices = @transform_0, window_bounds = array<i64: 1, 1>}, {transform_indices = @transform_1, window_bounds = array<i64: 4, 12>}, {transform_indices = @transform_2, window_bounds = array<i64: 8, 8, 128>}, {transform_indices = @transform_3, window_bounds = array<i64: 60, 8, 128>}]} {
    %c0 = arith.constant 0 : index
    %c0_0 = arith.constant 0 : index
    %0 = memref.load %arg1[%c0, %c0_0] : memref<1x1xf32, #tpu.memory_space<smem>>
    %c0_1 = arith.constant 0 : index
    %c0_2 = arith.constant 0 : index
    %c0_3 = arith.constant 0 : index
    %1 = vector.load %arg3[%c0_1, %c0_2, %c0_3] : memref<8x8x128xf32, #tpu.memory_space<vmem>>, vector<1x8x128xf32>
    %2 = vector.shape_cast %1 : vector<1x8x128xf32> to vector<8x128xf32>
    %3 = vector.broadcast %0 : f32 to vector<8x128xf32>
    %4 = arith.mulf %2, %3 : vector<8x128xf32>
    %c4 = arith.constant 4 : index
    %c0_4 = arith.constant 0 : index
    %c0_5 = arith.constant 0 : index
    %5 = vector.load %arg3[%c4, %c0_4, %c0_5] : memref<8x8x128xf32, #tpu.memory_space<vmem>>, vector<1x8x128xf32>
    %6 = vector.shape_cast %5 : vector<1x8x128xf32> to vector<8x128xf32>
    %7 = arith.addf %4, %6 : vector<8x128xf32>
    %8 = math.cos %7 : vector<8x128xf32>
    %9 = math.sin %7 : vector<8x128xf32>
    %c0_6 = arith.constant 0 : index
    %c0_7 = arith.constant 0 : index
    %10 = memref.load %arg2[%c0_6, %c0_7] : memref<4x12xf32, #tpu.memory_space<smem>>
    %c0_8 = arith.constant 0 : index
    %c1 = arith.constant 1 : index
    %11 = memref.load %arg2[%c0_8, %c1] : memref<4x12xf32, #tpu.memory_space<smem>>
    %c0_9 = arith.constant 0 : index
    %c2 = arith.constant 2 : index
    %12 = memref.load %arg2[%c0_9, %c2] : memref<4x12xf32, #tpu.memory_space<smem>>
    %c0_10 = arith.constant 0 : index
    %c3 = arith.constant 3 : index
    %13 = memref.load %arg2[%c0_10, %c3] : memref<4x12xf32, #tpu.memory_space<smem>>
    %c0_11 = arith.constant 0 : index
    %c4_12 = arith.constant 4 : index
    %14 = memref.load %arg2[%c0_11, %c4_12] : memref<4x12xf32, #tpu.memory_space<smem>>
    %c0_13 = arith.constant 0 : index
    %c5 = arith.constant 5 : index
    %15 = memref.load %arg2[%c0_13, %c5] : memref<4x12xf32, #tpu.memory_space<smem>>
    %c0_14 = arith.constant 0 : index
    %c6 = arith.constant 6 : index
    %16 = memref.load %arg2[%c0_14, %c6] : memref<4x12xf32, #tpu.memory_space<smem>>
    %17 = vector.broadcast %10 : f32 to vector<8x128xf32>
    %18 = arith.mulf %8, %17 : vector<8x128xf32>
    %19 = vector.broadcast %11 : f32 to vector<8x128xf32>
    %20 = arith.mulf %8, %19 : vector<8x128xf32>
    %21 = vector.broadcast %14 : f32 to vector<8x128xf32>
    %22 = arith.mulf %9, %21 : vector<8x128xf32>
    %23 = arith.subf %20, %22 : vector<8x128xf32>
    %24 = vector.broadcast %12 : f32 to vector<8x128xf32>
    %25 = arith.mulf %8, %24 : vector<8x128xf32>
    %26 = vector.broadcast %15 : f32 to vector<8x128xf32>
    %27 = arith.mulf %9, %26 : vector<8x128xf32>
    %28 = arith.subf %25, %27 : vector<8x128xf32>
    %29 = vector.broadcast %13 : f32 to vector<8x128xf32>
    %30 = arith.mulf %8, %29 : vector<8x128xf32>
    %31 = vector.broadcast %16 : f32 to vector<8x128xf32>
    %32 = arith.mulf %9, %31 : vector<8x128xf32>
    %33 = arith.subf %30, %32 : vector<8x128xf32>
    %34 = vector.broadcast %10 : f32 to vector<8x128xf32>
    %35 = arith.mulf %9, %34 : vector<8x128xf32>
    %36 = vector.broadcast %11 : f32 to vector<8x128xf32>
    %37 = arith.mulf %9, %36 : vector<8x128xf32>
    %38 = vector.broadcast %14 : f32 to vector<8x128xf32>
    %39 = arith.mulf %8, %38 : vector<8x128xf32>
    %40 = arith.addf %37, %39 : vector<8x128xf32>
    %41 = vector.broadcast %12 : f32 to vector<8x128xf32>
    %42 = arith.mulf %9, %41 : vector<8x128xf32>
    %43 = vector.broadcast %15 : f32 to vector<8x128xf32>
    %44 = arith.mulf %8, %43 : vector<8x128xf32>
    %45 = arith.addf %42, %44 : vector<8x128xf32>
    %46 = vector.broadcast %13 : f32 to vector<8x128xf32>
    %47 = arith.mulf %9, %46 : vector<8x128xf32>
    %48 = vector.broadcast %16 : f32 to vector<8x128xf32>
    %49 = arith.mulf %8, %48 : vector<8x128xf32>
    %50 = arith.addf %47, %49 : vector<8x128xf32>
    %c0_15 = arith.constant 0 : index
    %c7 = arith.constant 7 : index
    %51 = memref.load %arg2[%c0_15, %c7] : memref<4x12xf32, #tpu.memory_space<smem>>
    %c0_16 = arith.constant 0 : index
    %c8 = arith.constant 8 : index
    %52 = memref.load %arg2[%c0_16, %c8] : memref<4x12xf32, #tpu.memory_space<smem>>
    %c0_17 = arith.constant 0 : index
    %c9 = arith.constant 9 : index
    %53 = memref.load %arg2[%c0_17, %c9] : memref<4x12xf32, #tpu.memory_space<smem>>
    %c0_18 = arith.constant 0 : index
    %c10 = arith.constant 10 : index
    %54 = memref.load %arg2[%c0_18, %c10] : memref<4x12xf32, #tpu.memory_space<smem>>
    %c0_19 = arith.constant 0 : index
    %c0_20 = arith.constant 0 : index
    %c0_21 = arith.constant 0 : index
    %55 = vector.load %arg4[%c0_19, %c0_20, %c0_21] : memref<60x8x128xf32, #tpu.memory_space<vmem>>, vector<1x8x128xf32>
    %56 = vector.shape_cast %55 : vector<1x8x128xf32> to vector<8x128xf32>
    %57 = vector.shape_cast %18 : vector<8x128xf32> to vector<1x8x128xf32>
    tpu.vector_store %arg4[%c0_19, %c0_20, %c0_21], %57 {strides = array<i32>} : memref<60x8x128xf32, #tpu.memory_space<vmem>>, vector<1x8x128xf32>,
    %c1_22 = arith.constant 1 : index
    %c0_23 = arith.constant 0 : index
    %c0_24 = arith.constant 0 : index
    %58 = vector.load %arg4[%c1_22, %c0_23, %c0_24] : memref<60x8x128xf32, #tpu.memory_space<vmem>>, vector<1x8x128xf32>
    %59 = vector.shape_cast %58 : vector<1x8x128xf32> to vector<8x128xf32>
    %60 = vector.shape_cast %23 : vector<8x128xf32> to vector<1x8x128xf32>
    tpu.vector_store %arg4[%c1_22, %c0_23, %c0_24], %60 {strides = array<i32>} : memref<60x8x128xf32, #tpu.memory_space<vmem>>, vector<1x8x128xf32>,
    %c2_25 = arith.constant 2 : index
    %c0_26 = arith.constant 0 : index
    %c0_27 = arith.constant 0 : index
    %61 = vector.load %arg4[%c2_25, %c0_26, %c0_27] : memref<60x8x128xf32, #tpu.memory_space<vmem>>, vector<1x8x128xf32>
    %62 = vector.shape_cast %61 : vector<1x8x128xf32> to vector<8x128xf32>
    %63 = vector.shape_cast %28 : vector<8x128xf32> to vector<1x8x128xf32>
    tpu.vector_store %arg4[%c2_25, %c0_26, %c0_27], %63 {strides = array<i32>} : memref<60x8x128xf32, #tpu.memory_space<vmem>>, vector<1x8x128xf32>,
    %c3_28 = arith.constant 3 : index
    %c0_29 = arith.constant 0 : index
    %c0_30 = arith.constant 0 : index
    %64 = vector.load %arg4[%c3_28, %c0_29, %c0_30] : memref<60x8x128xf32, #tpu.memory_space<vmem>>, vector<1x8x128xf32>
    %65 = vector.shape_cast %64 : vector<1x8x128xf32> to vector<8x128xf32>
    %66 = vector.shape_cast %33 : vector<8x128xf32> to vector<1x8x128xf32>
    tpu.vector_store %arg4[%c3_28, %c0_29, %c0_30], %66 {strides = array<i32>} : memref<60x8x128xf32, #tpu.memory_space<vmem>>, vector<1x8x128xf32>,
    %c4_31 = arith.constant 4 : index
    %c0_32 = arith.constant 0 : index
    %c0_33 = arith.constant 0 : index
    %67 = vector.load %arg4[%c4_31, %c0_32, %c0_33] : memref<60x8x128xf32, #tpu.memory_space<vmem>>, vector<1x8x128xf32>
    %68 = vector.shape_cast %67 : vector<1x8x128xf32> to vector<8x128xf32>
    %69 = vector.shape_cast %35 : vector<8x128xf32> to vector<1x8x128xf32>
    tpu.vector_store %arg4[%c4_31, %c0_32, %c0_33], %69 {strides = array<i32>} : memref<60x8x128xf32, #tpu.memory_space<vmem>>, vector<1x8x128xf32>,
    %c5_34 = arith.constant 5 : index
    %c0_35 = arith.constant 0 : index
    %c0_36 = arith.constant 0 : index
    %70 = vector.load %arg4[%c5_34, %c0_35, %c0_36] : memref<60x8x128xf32, #tpu.memory_space<vmem>>, vector<1x8x128xf32>
    %71 = vector.shape_cast %70 : vector<1x8x128xf32> to vector<8x128xf32>
    %72 = vector.shape_cast %40 : vector<8x128xf32> to vector<1x8x128xf32>
    tpu.vector_store %arg4[%c5_34, %c0_35, %c0_36], %72 {strides = array<i32>} : memref<60x8x128xf32, #tpu.memory_space<vmem>>, vector<1x8x128xf32>,
    %c6_37 = arith.constant 6 : index
    %c0_38 = arith.constant 0 : index
    %c0_39 = arith.constant 0 : index
    %73 = vector.load %arg4[%c6_37, %c0_38, %c0_39] : memref<60x8x128xf32, #tpu.memory_space<vmem>>, vector<1x8x128xf32>
    %74 = vector.shape_cast %73 : vector<1x8x128xf32> to vector<8x128xf32>
    %75 = vector.shape_cast %45 : vector<8x128xf32> to vector<1x8x128xf32>
    tpu.vector_store %arg4[%c6_37, %c0_38, %c0_39], %75 {strides = array<i32>} : memref<60x8x128xf32, #tpu.memory_space<vmem>>, vector<1x8x128xf32>,
    %c7_40 = arith.constant 7 : index
    %c0_41 = arith.constant 0 : index
    %c0_42 = arith.constant 0 : index
    %76 = vector.load %arg4[%c7_40, %c0_41, %c0_42] : memref<60x8x128xf32, #tpu.memory_space<vmem>>, vector<1x8x128xf32>
    %77 = vector.shape_cast %76 : vector<1x8x128xf32> to vector<8x128xf32>
    %78 = vector.shape_cast %50 : vector<8x128xf32> to vector<1x8x128xf32>
    tpu.vector_store %arg4[%c7_40, %c0_41, %c0_42], %78 {strides = array<i32>} : memref<60x8x128xf32, #tpu.memory_space<vmem>>, vector<1x8x128xf32>,
    %79 = vector.broadcast %51 : f32 to vector<8x128xf32>
    %c8_43 = arith.constant 8 : index
    %c0_44 = arith.constant 0 : index
    %c0_45 = arith.constant 0 : index
    %80 = vector.load %arg4[%c8_43, %c0_44, %c0_45] : memref<60x8x128xf32, #tpu.memory_space<vmem>>, vector<1x8x128xf32>
    %81 = vector.shape_cast %80 : vector<1x8x128xf32> to vector<8x128xf32>
    %82 = vector.shape_cast %79 : vector<8x128xf32> to vector<1x8x128xf32>
    tpu.vector_store %arg4[%c8_43, %c0_44, %c0_45], %82 {strides = array<i32>} : memref<60x8x128xf32, #tpu.memory_space<vmem>>, vector<1x8x128xf32>,
    %83 = vector.broadcast %52 : f32 to vector<8x128xf32>
    %c9_46 = arith.constant 9 : index
    %c0_47 = arith.constant 0 : index
    %c0_48 = arith.constant 0 : index
    %84 = vector.load %arg4[%c9_46, %c0_47, %c0_48] : memref<60x8x128xf32, #tpu.memory_space<vmem>>, vector<1x8x128xf32>
    %85 = vector.shape_cast %84 : vector<1x8x128xf32> to vector<8x128xf32>
    %86 = vector.shape_cast %83 : vector<8x128xf32> to vector<1x8x128xf32>
    tpu.vector_store %arg4[%c9_46, %c0_47, %c0_48], %86 {strides = array<i32>} : memref<60x8x128xf32, #tpu.memory_space<vmem>>, vector<1x8x128xf32>,
    %87 = vector.broadcast %53 : f32 to vector<8x128xf32>
    %c10_49 = arith.constant 10 : index
    %c0_50 = arith.constant 0 : index
    %c0_51 = arith.constant 0 : index
    %88 = vector.load %arg4[%c10_49, %c0_50, %c0_51] : memref<60x8x128xf32, #tpu.memory_space<vmem>>, vector<1x8x128xf32>
    %89 = vector.shape_cast %88 : vector<1x8x128xf32> to vector<8x128xf32>
    %90 = vector.shape_cast %87 : vector<8x128xf32> to vector<1x8x128xf32>
    tpu.vector_store %arg4[%c10_49, %c0_50, %c0_51], %90 {strides = array<i32>} : memref<60x8x128xf32, #tpu.memory_space<vmem>>, vector<1x8x128xf32>,
    %91 = vector.broadcast %54 : f32 to vector<8x128xf32>
    %c11 = arith.constant 11 : index
    %c0_52 = arith.constant 0 : index
    %c0_53 = arith.constant 0 : index
    %92 = vector.load %arg4[%c11, %c0_52, %c0_53] : memref<60x8x128xf32, #tpu.memory_space<vmem>>, vector<1x8x128xf32>
    %93 = vector.shape_cast %92 : vector<1x8x128xf32> to vector<8x128xf32>
    %94 = vector.shape_cast %91 : vector<8x128xf32> to vector<1x8x128xf32>
    tpu.vector_store %arg4[%c11, %c0_52, %c0_53], %94 {strides = array<i32>} : memref<60x8x128xf32, #tpu.memory_space<vmem>>, vector<1x8x128xf32>,
    %c1_54 = arith.constant 1 : index
    %c0_55 = arith.constant 0 : index
    %c0_56 = arith.constant 0 : index
    %95 = vector.load %arg3[%c1_54, %c0_55, %c0_56] : memref<8x8x128xf32, #tpu.memory_space<vmem>>, vector<1x8x128xf32>
    %96 = vector.shape_cast %95 : vector<1x8x128xf32> to vector<8x128xf32>
    %97 = vector.broadcast %0 : f32 to vector<8x128xf32>
    %98 = arith.mulf %96, %97 : vector<8x128xf32>
    %c5_57 = arith.constant 5 : index
    %c0_58 = arith.constant 0 : index
    %c0_59 = arith.constant 0 : index
    %99 = vector.load %arg3[%c5_57, %c0_58, %c0_59] : memref<8x8x128xf32, #tpu.memory_space<vmem>>, vector<1x8x128xf32>
    %100 = vector.shape_cast %99 : vector<1x8x128xf32> to vector<8x128xf32>
    %101 = arith.addf %98, %100 : vector<8x128xf32>
    %102 = math.cos %101 : vector<8x128xf32>
    %103 = math.sin %101 : vector<8x128xf32>
    %c1_60 = arith.constant 1 : index
    %c0_61 = arith.constant 0 : index
    %104 = memref.load %arg2[%c1_60, %c0_61] : memref<4x12xf32, #tpu.memory_space<smem>>
    %c1_62 = arith.constant 1 : index
    %c1_63 = arith.constant 1 : index
    %105 = memref.load %arg2[%c1_62, %c1_63] : memref<4x12xf32, #tpu.memory_space<smem>>
    %c1_64 = arith.constant 1 : index
    %c2_65 = arith.constant 2 : index
    %106 = memref.load %arg2[%c1_64, %c2_65] : memref<4x12xf32, #tpu.memory_space<smem>>
    %c1_66 = arith.constant 1 : index
    %c3_67 = arith.constant 3 : index
    %107 = memref.load %arg2[%c1_66, %c3_67] : memref<4x12xf32, #tpu.memory_space<smem>>
    %c1_68 = arith.constant 1 : index
    %c4_69 = arith.constant 4 : index
    %108 = memref.load %arg2[%c1_68, %c4_69] : memref<4x12xf32, #tpu.memory_space<smem>>
    %c1_70 = arith.constant 1 : index
    %c5_71 = arith.constant 5 : index
    %109 = memref.load %arg2[%c1_70, %c5_71] : memref<4x12xf32, #tpu.memory_space<smem>>
    %c1_72 = arith.constant 1 : index
    %c6_73 = arith.constant 6 : index
    %110 = memref.load %arg2[%c1_72, %c6_73] : memref<4x12xf32, #tpu.memory_space<smem>>
    %111 = vector.broadcast %104 : f32 to vector<8x128xf32>
    %112 = arith.mulf %102, %111 : vector<8x128xf32>
    %113 = vector.broadcast %105 : f32 to vector<8x128xf32>
    %114 = arith.mulf %102, %113 : vector<8x128xf32>
    %115 = vector.broadcast %108 : f32 to vector<8x128xf32>
    %116 = arith.mulf %103, %115 : vector<8x128xf32>
    %117 = arith.subf %114, %116 : vector<8x128xf32>
    %118 = vector.broadcast %106 : f32 to vector<8x128xf32>
    %119 = arith.mulf %102, %118 : vector<8x128xf32>
    %120 = vector.broadcast %109 : f32 to vector<8x128xf32>
    %121 = arith.mulf %103, %120 : vector<8x128xf32>
    %122 = arith.subf %119, %121 : vector<8x128xf32>
    %123 = vector.broadcast %107 : f32 to vector<8x128xf32>
    %124 = arith.mulf %102, %123 : vector<8x128xf32>
    %125 = vector.broadcast %110 : f32 to vector<8x128xf32>
    %126 = arith.mulf %103, %125 : vector<8x128xf32>
    %127 = arith.subf %124, %126 : vector<8x128xf32>
    %128 = vector.broadcast %104 : f32 to vector<8x128xf32>
    %129 = arith.mulf %103, %128 : vector<8x128xf32>
    %130 = vector.broadcast %105 : f32 to vector<8x128xf32>
    %131 = arith.mulf %103, %130 : vector<8x128xf32>
    %132 = vector.broadcast %108 : f32 to vector<8x128xf32>
    %133 = arith.mulf %102, %132 : vector<8x128xf32>
    %134 = arith.addf %131, %133 : vector<8x128xf32>
    %135 = vector.broadcast %106 : f32 to vector<8x128xf32>
    %136 = arith.mulf %103, %135 : vector<8x128xf32>
    %137 = vector.broadcast %109 : f32 to vector<8x128xf32>
    %138 = arith.mulf %102, %137 : vector<8x128xf32>
    %139 = arith.addf %136, %138 : vector<8x128xf32>
    %140 = vector.broadcast %107 : f32 to vector<8x128xf32>
    %141 = arith.mulf %103, %140 : vector<8x128xf32>
    %142 = vector.broadcast %110 : f32 to vector<8x128xf32>
    %143 = arith.mulf %102, %142 : vector<8x128xf32>
    %144 = arith.addf %141, %143 : vector<8x128xf32>
    %c1_74 = arith.constant 1 : index
    %c7_75 = arith.constant 7 : index
    %145 = memref.load %arg2[%c1_74, %c7_75] : memref<4x12xf32, #tpu.memory_space<smem>>
    %c1_76 = arith.constant 1 : index
    %c8_77 = arith.constant 8 : index
    %146 = memref.load %arg2[%c1_76, %c8_77] : memref<4x12xf32, #tpu.memory_space<smem>>
    %c1_78 = arith.constant 1 : index
    %c9_79 = arith.constant 9 : index
    %147 = memref.load %arg2[%c1_78, %c9_79] : memref<4x12xf32, #tpu.memory_space<smem>>
    %c1_80 = arith.constant 1 : index
    %c10_81 = arith.constant 10 : index
    %148 = memref.load %arg2[%c1_80, %c10_81] : memref<4x12xf32, #tpu.memory_space<smem>>
    %149 = arith.mulf %18, %112 : vector<8x128xf32>
    %150 = arith.mulf %23, %129 : vector<8x128xf32>
    %151 = arith.addf %149, %150 : vector<8x128xf32>
    %152 = vector.broadcast %145 : f32 to vector<8x128xf32>
    %153 = arith.mulf %28, %152 : vector<8x128xf32>
    %154 = arith.addf %151, %153 : vector<8x128xf32>
    %155 = arith.mulf %18, %117 : vector<8x128xf32>
    %156 = arith.mulf %23, %134 : vector<8x128xf32>
    %157 = arith.addf %155, %156 : vector<8x128xf32>
    %158 = vector.broadcast %146 : f32 to vector<8x128xf32>
    %159 = arith.mulf %28, %158 : vector<8x128xf32>
    %160 = arith.addf %157, %159 : vector<8x128xf32>
    %161 = arith.mulf %18, %122 : vector<8x128xf32>
    %162 = arith.mulf %23, %139 : vector<8x128xf32>
    %163 = arith.addf %161, %162 : vector<8x128xf32>
    %164 = vector.broadcast %147 : f32 to vector<8x128xf32>
    %165 = arith.mulf %28, %164 : vector<8x128xf32>
    %166 = arith.addf %163, %165 : vector<8x128xf32>
    %167 = arith.mulf %18, %127 : vector<8x128xf32>
    %168 = arith.mulf %23, %144 : vector<8x128xf32>
    %169 = arith.addf %167, %168 : vector<8x128xf32>
    %170 = vector.broadcast %148 : f32 to vector<8x128xf32>
    %171 = arith.mulf %28, %170 : vector<8x128xf32>
    %172 = arith.addf %169, %171 : vector<8x128xf32>
    %173 = arith.addf %172, %33 : vector<8x128xf32>
    %174 = arith.mulf %35, %112 : vector<8x128xf32>
    %175 = arith.mulf %40, %129 : vector<8x128xf32>
    %176 = arith.addf %174, %175 : vector<8x128xf32>
    %177 = vector.broadcast %145 : f32 to vector<8x128xf32>
    %178 = arith.mulf %45, %177 : vector<8x128xf32>
    %179 = arith.addf %176, %178 : vector<8x128xf32>
    %180 = arith.mulf %35, %117 : vector<8x128xf32>
    %181 = arith.mulf %40, %134 : vector<8x128xf32>
    %182 = arith.addf %180, %181 : vector<8x128xf32>
    %183 = vector.broadcast %146 : f32 to vector<8x128xf32>
    %184 = arith.mulf %45, %183 : vector<8x128xf32>
    %185 = arith.addf %182, %184 : vector<8x128xf32>
    %186 = arith.mulf %35, %122 : vector<8x128xf32>
    %187 = arith.mulf %40, %139 : vector<8x128xf32>
    %188 = arith.addf %186, %187 : vector<8x128xf32>
    %189 = vector.broadcast %147 : f32 to vector<8x128xf32>
    %190 = arith.mulf %45, %189 : vector<8x128xf32>
    %191 = arith.addf %188, %190 : vector<8x128xf32>
    %192 = arith.mulf %35, %127 : vector<8x128xf32>
    %193 = arith.mulf %40, %144 : vector<8x128xf32>
    %194 = arith.addf %192, %193 : vector<8x128xf32>
    %195 = vector.broadcast %148 : f32 to vector<8x128xf32>
    %196 = arith.mulf %45, %195 : vector<8x128xf32>
    %197 = arith.addf %194, %196 : vector<8x128xf32>
    %198 = arith.addf %197, %50 : vector<8x128xf32>
    %199 = vector.broadcast %51 : f32 to vector<8x128xf32>
    %200 = arith.mulf %199, %112 : vector<8x128xf32>
    %201 = vector.broadcast %52 : f32 to vector<8x128xf32>
    %202 = arith.mulf %201, %129 : vector<8x128xf32>
    %203 = arith.addf %200, %202 : vector<8x128xf32>
    %204 = arith.mulf %53, %145 : f32
    %205 = vector.broadcast %204 : f32 to vector<8x128xf32>
    %206 = arith.addf %203, %205 : vector<8x128xf32>
    %207 = vector.broadcast %51 : f32 to vector<8x128xf32>
    %208 = arith.mulf %207, %117 : vector<8x128xf32>
    %209 = vector.broadcast %52 : f32 to vector<8x128xf32>
    %210 = arith.mulf %209, %134 : vector<8x128xf32>
    %211 = arith.addf %208, %210 : vector<8x128xf32>
    %212 = arith.mulf %53, %146 : f32
    %213 = vector.broadcast %212 : f32 to vector<8x128xf32>
    %214 = arith.addf %211, %213 : vector<8x128xf32>
    %215 = vector.broadcast %51 : f32 to vector<8x128xf32>
    %216 = arith.mulf %215, %122 : vector<8x128xf32>
    %217 = vector.broadcast %52 : f32 to vector<8x128xf32>
    %218 = arith.mulf %217, %139 : vector<8x128xf32>
    %219 = arith.addf %216, %218 : vector<8x128xf32>
    %220 = arith.mulf %53, %147 : f32
    %221 = vector.broadcast %220 : f32 to vector<8x128xf32>
    %222 = arith.addf %219, %221 : vector<8x128xf32>
    %223 = vector.broadcast %51 : f32 to vector<8x128xf32>
    %224 = arith.mulf %223, %127 : vector<8x128xf32>
    %225 = vector.broadcast %52 : f32 to vector<8x128xf32>
    %226 = arith.mulf %225, %144 : vector<8x128xf32>
    %227 = arith.addf %224, %226 : vector<8x128xf32>
    %228 = arith.mulf %53, %148 : f32
    %229 = vector.broadcast %228 : f32 to vector<8x128xf32>
    %230 = arith.addf %227, %229 : vector<8x128xf32>
    %231 = vector.broadcast %54 : f32 to vector<8x128xf32>
    %232 = arith.addf %230, %231 : vector<8x128xf32>
    %c12 = arith.constant 12 : index
    %c0_82 = arith.constant 0 : index
    %c0_83 = arith.constant 0 : index
    %233 = vector.load %arg4[%c12, %c0_82, %c0_83] : memref<60x8x128xf32, #tpu.memory_space<vmem>>, vector<1x8x128xf32>
    %234 = vector.shape_cast %233 : vector<1x8x128xf32> to vector<8x128xf32>
    %235 = vector.shape_cast %154 : vector<8x128xf32> to vector<1x8x128xf32>
    tpu.vector_store %arg4[%c12, %c0_82, %c0_83], %235 {strides = array<i32>} : memref<60x8x128xf32, #tpu.memory_space<vmem>>, vector<1x8x128xf32>,
    %c13 = arith.constant 13 : index
    %c0_84 = arith.constant 0 : index
    %c0_85 = arith.constant 0 : index
    %236 = vector.load %arg4[%c13, %c0_84, %c0_85] : memref<60x8x128xf32, #tpu.memory_space<vmem>>, vector<1x8x128xf32>
    %237 = vector.shape_cast %236 : vector<1x8x128xf32> to vector<8x128xf32>
    %238 = vector.shape_cast %160 : vector<8x128xf32> to vector<1x8x128xf32>
    tpu.vector_store %arg4[%c13, %c0_84, %c0_85], %238 {strides = array<i32>} : memref<60x8x128xf32, #tpu.memory_space<vmem>>, vector<1x8x128xf32>,
    %c14 = arith.constant 14 : index
    %c0_86 = arith.constant 0 : index
    %c0_87 = arith.constant 0 : index
    %239 = vector.load %arg4[%c14, %c0_86, %c0_87] : memref<60x8x128xf32, #tpu.memory_space<vmem>>, vector<1x8x128xf32>
    %240 = vector.shape_cast %239 : vector<1x8x128xf32> to vector<8x128xf32>
    %241 = vector.shape_cast %166 : vector<8x128xf32> to vector<1x8x128xf32>
    tpu.vector_store %arg4[%c14, %c0_86, %c0_87], %241 {strides = array<i32>} : memref<60x8x128xf32, #tpu.memory_space<vmem>>, vector<1x8x128xf32>,
    %c15 = arith.constant 15 : index
    %c0_88 = arith.constant 0 : index
    %c0_89 = arith.constant 0 : index
    %242 = vector.load %arg4[%c15, %c0_88, %c0_89] : memref<60x8x128xf32, #tpu.memory_space<vmem>>, vector<1x8x128xf32>
    %243 = vector.shape_cast %242 : vector<1x8x128xf32> to vector<8x128xf32>
    %244 = vector.shape_cast %173 : vector<8x128xf32> to vector<1x8x128xf32>
    tpu.vector_store %arg4[%c15, %c0_88, %c0_89], %244 {strides = array<i32>} : memref<60x8x128xf32, #tpu.memory_space<vmem>>, vector<1x8x128xf32>,
    %c16 = arith.constant 16 : index
    %c0_90 = arith.constant 0 : index
    %c0_91 = arith.constant 0 : index
    %245 = vector.load %arg4[%c16, %c0_90, %c0_91] : memref<60x8x128xf32, #tpu.memory_space<vmem>>, vector<1x8x128xf32>
    %246 = vector.shape_cast %245 : vector<1x8x128xf32> to vector<8x128xf32>
    %247 = vector.shape_cast %179 : vector<8x128xf32> to vector<1x8x128xf32>
    tpu.vector_store %arg4[%c16, %c0_90, %c0_91], %247 {strides = array<i32>} : memref<60x8x128xf32, #tpu.memory_space<vmem>>, vector<1x8x128xf32>,
    %c17 = arith.constant 17 : index
    %c0_92 = arith.constant 0 : index
    %c0_93 = arith.constant 0 : index
    %248 = vector.load %arg4[%c17, %c0_92, %c0_93] : memref<60x8x128xf32, #tpu.memory_space<vmem>>, vector<1x8x128xf32>
    %249 = vector.shape_cast %248 : vector<1x8x128xf32> to vector<8x128xf32>
    %250 = vector.shape_cast %185 : vector<8x128xf32> to vector<1x8x128xf32>
    tpu.vector_store %arg4[%c17, %c0_92, %c0_93], %250 {strides = array<i32>} : memref<60x8x128xf32, #tpu.memory_space<vmem>>, vector<1x8x128xf32>,
    %c18 = arith.constant 18 : index
    %c0_94 = arith.constant 0 : index
    %c0_95 = arith.constant 0 : index
    %251 = vector.load %arg4[%c18, %c0_94, %c0_95] : memref<60x8x128xf32, #tpu.memory_space<vmem>>, vector<1x8x128xf32>
    %252 = vector.shape_cast %251 : vector<1x8x128xf32> to vector<8x128xf32>
    %253 = vector.shape_cast %191 : vector<8x128xf32> to vector<1x8x128xf32>
    tpu.vector_store %arg4[%c18, %c0_94, %c0_95], %253 {strides = array<i32>} : memref<60x8x128xf32, #tpu.memory_space<vmem>>, vector<1x8x128xf32>,
    %c19 = arith.constant 19 : index
    %c0_96 = arith.constant 0 : index
    %c0_97 = arith.constant 0 : index
    %254 = vector.load %arg4[%c19, %c0_96, %c0_97] : memref<60x8x128xf32, #tpu.memory_space<vmem>>, vector<1x8x128xf32>
    %255 = vector.shape_cast %254 : vector<1x8x128xf32> to vector<8x128xf32>
    %256 = vector.shape_cast %198 : vector<8x128xf32> to vector<1x8x128xf32>
    tpu.vector_store %arg4[%c19, %c0_96, %c0_97], %256 {strides = array<i32>} : memref<60x8x128xf32, #tpu.memory_space<vmem>>, vector<1x8x128xf32>,
    %c20 = arith.constant 20 : index
    %c0_98 = arith.constant 0 : index
    %c0_99 = arith.constant 0 : index
    %257 = vector.load %arg4[%c20, %c0_98, %c0_99] : memref<60x8x128xf32, #tpu.memory_space<vmem>>, vector<1x8x128xf32>
    %258 = vector.shape_cast %257 : vector<1x8x128xf32> to vector<8x128xf32>
    %259 = vector.shape_cast %206 : vector<8x128xf32> to vector<1x8x128xf32>
    tpu.vector_store %arg4[%c20, %c0_98, %c0_99], %259 {strides = array<i32>} : memref<60x8x128xf32, #tpu.memory_space<vmem>>, vector<1x8x128xf32>,
    %c21 = arith.constant 21 : index
    %c0_100 = arith.constant 0 : index
    %c0_101 = arith.constant 0 : index
    %260 = vector.load %arg4[%c21, %c0_100, %c0_101] : memref<60x8x128xf32, #tpu.memory_space<vmem>>, vector<1x8x128xf32>
    %261 = vector.shape_cast %260 : vector<1x8x128xf32> to vector<8x128xf32>
    %262 = vector.shape_cast %214 : vector<8x128xf32> to vector<1x8x128xf32>
    tpu.vector_store %arg4[%c21, %c0_100, %c0_101], %262 {strides = array<i32>} : memref<60x8x128xf32, #tpu.memory_space<vmem>>, vector<1x8x128xf32>,
    %c22 = arith.constant 22 : index
    %c0_102 = arith.constant 0 : index
    %c0_103 = arith.constant 0 : index
    %263 = vector.load %arg4[%c22, %c0_102, %c0_103] : memref<60x8x128xf32, #tpu.memory_space<vmem>>, vector<1x8x128xf32>
    %264 = vector.shape_cast %263 : vector<1x8x128xf32> to vector<8x128xf32>
    %265 = vector.shape_cast %222 : vector<8x128xf32> to vector<1x8x128xf32>
    tpu.vector_store %arg4[%c22, %c0_102, %c0_103], %265 {strides = array<i32>} : memref<60x8x128xf32, #tpu.memory_space<vmem>>, vector<1x8x128xf32>,
    %c23 = arith.constant 23 : index
    %c0_104 = arith.constant 0 : index
    %c0_105 = arith.constant 0 : index
    %266 = vector.load %arg4[%c23, %c0_104, %c0_105] : memref<60x8x128xf32, #tpu.memory_space<vmem>>, vector<1x8x128xf32>
    %267 = vector.shape_cast %266 : vector<1x8x128xf32> to vector<8x128xf32>
    %268 = vector.shape_cast %232 : vector<8x128xf32> to vector<1x8x128xf32>
    tpu.vector_store %arg4[%c23, %c0_104, %c0_105], %268 {strides = array<i32>} : memref<60x8x128xf32, #tpu.memory_space<vmem>>, vector<1x8x128xf32>,
    %c2_106 = arith.constant 2 : index
    %c0_107 = arith.constant 0 : index
    %c0_108 = arith.constant 0 : index
    %269 = vector.load %arg3[%c2_106, %c0_107, %c0_108] : memref<8x8x128xf32, #tpu.memory_space<vmem>>, vector<1x8x128xf32>
    %270 = vector.shape_cast %269 : vector<1x8x128xf32> to vector<8x128xf32>
    %271 = vector.broadcast %0 : f32 to vector<8x128xf32>
    %272 = arith.mulf %270, %271 : vector<8x128xf32>
    %c6_109 = arith.constant 6 : index
    %c0_110 = arith.constant 0 : index
    %c0_111 = arith.constant 0 : index
    %273 = vector.load %arg3[%c6_109, %c0_110, %c0_111] : memref<8x8x128xf32, #tpu.memory_space<vmem>>, vector<1x8x128xf32>
    %274 = vector.shape_cast %273 : vector<1x8x128xf32> to vector<8x128xf32>
    %275 = arith.addf %272, %274 : vector<8x128xf32>
    %276 = math.cos %275 : vector<8x128xf32>
    %277 = math.sin %275 : vector<8x128xf32>
    %c2_112 = arith.constant 2 : index
    %c0_113 = arith.constant 0 : index
    %278 = memref.load %arg2[%c2_112, %c0_113] : memref<4x12xf32, #tpu.memory_space<smem>>
    %c2_114 = arith.constant 2 : index
    %c1_115 = arith.constant 1 : index
    %279 = memref.load %arg2[%c2_114, %c1_115] : memref<4x12xf32, #tpu.memory_space<smem>>
    %c2_116 = arith.constant 2 : index
    %c2_117 = arith.constant 2 : index
    %280 = memref.load %arg2[%c2_116, %c2_117] : memref<4x12xf32, #tpu.memory_space<smem>>
    %c2_118 = arith.constant 2 : index
    %c3_119 = arith.constant 3 : index
    %281 = memref.load %arg2[%c2_118, %c3_119] : memref<4x12xf32, #tpu.memory_space<smem>>
    %c2_120 = arith.constant 2 : index
    %c4_121 = arith.constant 4 : index
    %282 = memref.load %arg2[%c2_120, %c4_121] : memref<4x12xf32, #tpu.memory_space<smem>>
    %c2_122 = arith.constant 2 : index
    %c5_123 = arith.constant 5 : index
    %283 = memref.load %arg2[%c2_122, %c5_123] : memref<4x12xf32, #tpu.memory_space<smem>>
    %c2_124 = arith.constant 2 : index
    %c6_125 = arith.constant 6 : index
    %284 = memref.load %arg2[%c2_124, %c6_125] : memref<4x12xf32, #tpu.memory_space<smem>>
    %285 = vector.broadcast %278 : f32 to vector<8x128xf32>
    %286 = arith.mulf %276, %285 : vector<8x128xf32>
    %287 = vector.broadcast %279 : f32 to vector<8x128xf32>
    %288 = arith.mulf %276, %287 : vector<8x128xf32>
    %289 = vector.broadcast %282 : f32 to vector<8x128xf32>
    %290 = arith.mulf %277, %289 : vector<8x128xf32>
    %291 = arith.subf %288, %290 : vector<8x128xf32>
    %292 = vector.broadcast %280 : f32 to vector<8x128xf32>
    %293 = arith.mulf %276, %292 : vector<8x128xf32>
    %294 = vector.broadcast %283 : f32 to vector<8x128xf32>
    %295 = arith.mulf %277, %294 : vector<8x128xf32>
    %296 = arith.subf %293, %295 : vector<8x128xf32>
    %297 = vector.broadcast %281 : f32 to vector<8x128xf32>
    %298 = arith.mulf %276, %297 : vector<8x128xf32>
    %299 = vector.broadcast %284 : f32 to vector<8x128xf32>
    %300 = arith.mulf %277, %299 : vector<8x128xf32>
    %301 = arith.subf %298, %300 : vector<8x128xf32>
    %302 = vector.broadcast %278 : f32 to vector<8x128xf32>
    %303 = arith.mulf %277, %302 : vector<8x128xf32>
    %304 = vector.broadcast %279 : f32 to vector<8x128xf32>
    %305 = arith.mulf %277, %304 : vector<8x128xf32>
    %306 = vector.broadcast %282 : f32 to vector<8x128xf32>
    %307 = arith.mulf %276, %306 : vector<8x128xf32>
    %308 = arith.addf %305, %307 : vector<8x128xf32>
    %309 = vector.broadcast %280 : f32 to vector<8x128xf32>
    %310 = arith.mulf %277, %309 : vector<8x128xf32>
    %311 = vector.broadcast %283 : f32 to vector<8x128xf32>
    %312 = arith.mulf %276, %311 : vector<8x128xf32>
    %313 = arith.addf %310, %312 : vector<8x128xf32>
    %314 = vector.broadcast %281 : f32 to vector<8x128xf32>
    %315 = arith.mulf %277, %314 : vector<8x128xf32>
    %316 = vector.broadcast %284 : f32 to vector<8x128xf32>
    %317 = arith.mulf %276, %316 : vector<8x128xf32>
    %318 = arith.addf %315, %317 : vector<8x128xf32>
    %c2_126 = arith.constant 2 : index
    %c7_127 = arith.constant 7 : index
    %319 = memref.load %arg2[%c2_126, %c7_127] : memref<4x12xf32, #tpu.memory_space<smem>>
    %c2_128 = arith.constant 2 : index
    %c8_129 = arith.constant 8 : index
    %320 = memref.load %arg2[%c2_128, %c8_129] : memref<4x12xf32, #tpu.memory_space<smem>>
    %c2_130 = arith.constant 2 : index
    %c9_131 = arith.constant 9 : index
    %321 = memref.load %arg2[%c2_130, %c9_131] : memref<4x12xf32, #tpu.memory_space<smem>>
    %c2_132 = arith.constant 2 : index
    %c10_133 = arith.constant 10 : index
    %322 = memref.load %arg2[%c2_132, %c10_133] : memref<4x12xf32, #tpu.memory_space<smem>>
    %323 = arith.mulf %154, %286 : vector<8x128xf32>
    %324 = arith.mulf %160, %303 : vector<8x128xf32>
    %325 = arith.addf %323, %324 : vector<8x128xf32>
    %326 = vector.broadcast %319 : f32 to vector<8x128xf32>
    %327 = arith.mulf %166, %326 : vector<8x128xf32>
    %328 = arith.addf %325, %327 : vector<8x128xf32>
    %329 = arith.mulf %154, %291 : vector<8x128xf32>
    %330 = arith.mulf %160, %308 : vector<8x128xf32>
    %331 = arith.addf %329, %330 : vector<8x128xf32>
    %332 = vector.broadcast %320 : f32 to vector<8x128xf32>
    %333 = arith.mulf %166, %332 : vector<8x128xf32>
    %334 = arith.addf %331, %333 : vector<8x128xf32>
    %335 = arith.mulf %154, %296 : vector<8x128xf32>
    %336 = arith.mulf %160, %313 : vector<8x128xf32>
    %337 = arith.addf %335, %336 : vector<8x128xf32>
    %338 = vector.broadcast %321 : f32 to vector<8x128xf32>
    %339 = arith.mulf %166, %338 : vector<8x128xf32>
    %340 = arith.addf %337, %339 : vector<8x128xf32>
    %341 = arith.mulf %154, %301 : vector<8x128xf32>
    %342 = arith.mulf %160, %318 : vector<8x128xf32>
    %343 = arith.addf %341, %342 : vector<8x128xf32>
    %344 = vector.broadcast %322 : f32 to vector<8x128xf32>
    %345 = arith.mulf %166, %344 : vector<8x128xf32>
    %346 = arith.addf %343, %345 : vector<8x128xf32>
    %347 = arith.addf %346, %173 : vector<8x128xf32>
    %348 = arith.mulf %179, %286 : vector<8x128xf32>
    %349 = arith.mulf %185, %303 : vector<8x128xf32>
    %350 = arith.addf %348, %349 : vector<8x128xf32>
    %351 = vector.broadcast %319 : f32 to vector<8x128xf32>
    %352 = arith.mulf %191, %351 : vector<8x128xf32>
    %353 = arith.addf %350, %352 : vector<8x128xf32>
    %354 = arith.mulf %179, %291 : vector<8x128xf32>
    %355 = arith.mulf %185, %308 : vector<8x128xf32>
    %356 = arith.addf %354, %355 : vector<8x128xf32>
    %357 = vector.broadcast %320 : f32 to vector<8x128xf32>
    %358 = arith.mulf %191, %357 : vector<8x128xf32>
    %359 = arith.addf %356, %358 : vector<8x128xf32>
    %360 = arith.mulf %179, %296 : vector<8x128xf32>
    %361 = arith.mulf %185, %313 : vector<8x128xf32>
    %362 = arith.addf %360, %361 : vector<8x128xf32>
    %363 = vector.broadcast %321 : f32 to vector<8x128xf32>
    %364 = arith.mulf %191, %363 : vector<8x128xf32>
    %365 = arith.addf %362, %364 : vector<8x128xf32>
    %366 = arith.mulf %179, %301 : vector<8x128xf32>
    %367 = arith.mulf %185, %318 : vector<8x128xf32>
    %368 = arith.addf %366, %367 : vector<8x128xf32>
    %369 = vector.broadcast %322 : f32 to vector<8x128xf32>
    %370 = arith.mulf %191, %369 : vector<8x128xf32>
    %371 = arith.addf %368, %370 : vector<8x128xf32>
    %372 = arith.addf %371, %198 : vector<8x128xf32>
    %373 = arith.mulf %206, %286 : vector<8x128xf32>
    %374 = arith.mulf %214, %303 : vector<8x128xf32>
    %375 = arith.addf %373, %374 : vector<8x128xf32>
    %376 = vector.broadcast %319 : f32 to vector<8x128xf32>
    %377 = arith.mulf %222, %376 : vector<8x128xf32>
    %378 = arith.addf %375, %377 : vector<8x128xf32>
    %379 = arith.mulf %206, %291 : vector<8x128xf32>
    %380 = arith.mulf %214, %308 : vector<8x128xf32>
    %381 = arith.addf %379, %380 : vector<8x128xf32>
    %382 = vector.broadcast %320 : f32 to vector<8x128xf32>
    %383 = arith.mulf %222, %382 : vector<8x128xf32>
    %384 = arith.addf %381, %383 : vector<8x128xf32>
    %385 = arith.mulf %206, %296 : vector<8x128xf32>
    %386 = arith.mulf %214, %313 : vector<8x128xf32>
    %387 = arith.addf %385, %386 : vector<8x128xf32>
    %388 = vector.broadcast %321 : f32 to vector<8x128xf32>
    %389 = arith.mulf %222, %388 : vector<8x128xf32>
    %390 = arith.addf %387, %389 : vector<8x128xf32>
    %391 = arith.mulf %206, %301 : vector<8x128xf32>
    %392 = arith.mulf %214, %318 : vector<8x128xf32>
    %393 = arith.addf %391, %392 : vector<8x128xf32>
    %394 = vector.broadcast %322 : f32 to vector<8x128xf32>
    %395 = arith.mulf %222, %394 : vector<8x128xf32>
    %396 = arith.addf %393, %395 : vector<8x128xf32>
    %397 = arith.addf %396, %232 : vector<8x128xf32>
    %c24 = arith.constant 24 : index
    %c0_134 = arith.constant 0 : index
    %c0_135 = arith.constant 0 : index
    %398 = vector.load %arg4[%c24, %c0_134, %c0_135] : memref<60x8x128xf32, #tpu.memory_space<vmem>>, vector<1x8x128xf32>
    %399 = vector.shape_cast %398 : vector<1x8x128xf32> to vector<8x128xf32>
    %400 = vector.shape_cast %328 : vector<8x128xf32> to vector<1x8x128xf32>
    tpu.vector_store %arg4[%c24, %c0_134, %c0_135], %400 {strides = array<i32>} : memref<60x8x128xf32, #tpu.memory_space<vmem>>, vector<1x8x128xf32>,
    %c25 = arith.constant 25 : index
    %c0_136 = arith.constant 0 : index
    %c0_137 = arith.constant 0 : index
    %401 = vector.load %arg4[%c25, %c0_136, %c0_137] : memref<60x8x128xf32, #tpu.memory_space<vmem>>, vector<1x8x128xf32>
    %402 = vector.shape_cast %401 : vector<1x8x128xf32> to vector<8x128xf32>
    %403 = vector.shape_cast %334 : vector<8x128xf32> to vector<1x8x128xf32>
    tpu.vector_store %arg4[%c25, %c0_136, %c0_137], %403 {strides = array<i32>} : memref<60x8x128xf32, #tpu.memory_space<vmem>>, vector<1x8x128xf32>,
    %c26 = arith.constant 26 : index
    %c0_138 = arith.constant 0 : index
    %c0_139 = arith.constant 0 : index
    %404 = vector.load %arg4[%c26, %c0_138, %c0_139] : memref<60x8x128xf32, #tpu.memory_space<vmem>>, vector<1x8x128xf32>
    %405 = vector.shape_cast %404 : vector<1x8x128xf32> to vector<8x128xf32>
    %406 = vector.shape_cast %340 : vector<8x128xf32> to vector<1x8x128xf32>
    tpu.vector_store %arg4[%c26, %c0_138, %c0_139], %406 {strides = array<i32>} : memref<60x8x128xf32, #tpu.memory_space<vmem>>, vector<1x8x128xf32>,
    %c27 = arith.constant 27 : index
    %c0_140 = arith.constant 0 : index
    %c0_141 = arith.constant 0 : index
    %407 = vector.load %arg4[%c27, %c0_140, %c0_141] : memref<60x8x128xf32, #tpu.memory_space<vmem>>, vector<1x8x128xf32>
    %408 = vector.shape_cast %407 : vector<1x8x128xf32> to vector<8x128xf32>
    %409 = vector.shape_cast %347 : vector<8x128xf32> to vector<1x8x128xf32>
    tpu.vector_store %arg4[%c27, %c0_140, %c0_141], %409 {strides = array<i32>} : memref<60x8x128xf32, #tpu.memory_space<vmem>>, vector<1x8x128xf32>,
    %c28 = arith.constant 28 : index
    %c0_142 = arith.constant 0 : index
    %c0_143 = arith.constant 0 : index
    %410 = vector.load %arg4[%c28, %c0_142, %c0_143] : memref<60x8x128xf32, #tpu.memory_space<vmem>>, vector<1x8x128xf32>
    %411 = vector.shape_cast %410 : vector<1x8x128xf32> to vector<8x128xf32>
    %412 = vector.shape_cast %353 : vector<8x128xf32> to vector<1x8x128xf32>
    tpu.vector_store %arg4[%c28, %c0_142, %c0_143], %412 {strides = array<i32>} : memref<60x8x128xf32, #tpu.memory_space<vmem>>, vector<1x8x128xf32>,
    %c29 = arith.constant 29 : index
    %c0_144 = arith.constant 0 : index
    %c0_145 = arith.constant 0 : index
    %413 = vector.load %arg4[%c29, %c0_144, %c0_145] : memref<60x8x128xf32, #tpu.memory_space<vmem>>, vector<1x8x128xf32>
    %414 = vector.shape_cast %413 : vector<1x8x128xf32> to vector<8x128xf32>
    %415 = vector.shape_cast %359 : vector<8x128xf32> to vector<1x8x128xf32>
    tpu.vector_store %arg4[%c29, %c0_144, %c0_145], %415 {strides = array<i32>} : memref<60x8x128xf32, #tpu.memory_space<vmem>>, vector<1x8x128xf32>,
    %c30 = arith.constant 30 : index
    %c0_146 = arith.constant 0 : index
    %c0_147 = arith.constant 0 : index
    %416 = vector.load %arg4[%c30, %c0_146, %c0_147] : memref<60x8x128xf32, #tpu.memory_space<vmem>>, vector<1x8x128xf32>
    %417 = vector.shape_cast %416 : vector<1x8x128xf32> to vector<8x128xf32>
    %418 = vector.shape_cast %365 : vector<8x128xf32> to vector<1x8x128xf32>
    tpu.vector_store %arg4[%c30, %c0_146, %c0_147], %418 {strides = array<i32>} : memref<60x8x128xf32, #tpu.memory_space<vmem>>, vector<1x8x128xf32>,
    %c31 = arith.constant 31 : index
    %c0_148 = arith.constant 0 : index
    %c0_149 = arith.constant 0 : index
    %419 = vector.load %arg4[%c31, %c0_148, %c0_149] : memref<60x8x128xf32, #tpu.memory_space<vmem>>, vector<1x8x128xf32>
    %420 = vector.shape_cast %419 : vector<1x8x128xf32> to vector<8x128xf32>
    %421 = vector.shape_cast %372 : vector<8x128xf32> to vector<1x8x128xf32>
    tpu.vector_store %arg4[%c31, %c0_148, %c0_149], %421 {strides = array<i32>} : memref<60x8x128xf32, #tpu.memory_space<vmem>>, vector<1x8x128xf32>,
    %c32 = arith.constant 32 : index
    %c0_150 = arith.constant 0 : index
    %c0_151 = arith.constant 0 : index
    %422 = vector.load %arg4[%c32, %c0_150, %c0_151] : memref<60x8x128xf32, #tpu.memory_space<vmem>>, vector<1x8x128xf32>
    %423 = vector.shape_cast %422 : vector<1x8x128xf32> to vector<8x128xf32>
    %424 = vector.shape_cast %378 : vector<8x128xf32> to vector<1x8x128xf32>
    tpu.vector_store %arg4[%c32, %c0_150, %c0_151], %424 {strides = array<i32>} : memref<60x8x128xf32, #tpu.memory_space<vmem>>, vector<1x8x128xf32>,
    %c33 = arith.constant 33 : index
    %c0_152 = arith.constant 0 : index
    %c0_153 = arith.constant 0 : index
    %425 = vector.load %arg4[%c33, %c0_152, %c0_153] : memref<60x8x128xf32, #tpu.memory_space<vmem>>, vector<1x8x128xf32>
    %426 = vector.shape_cast %425 : vector<1x8x128xf32> to vector<8x128xf32>
    %427 = vector.shape_cast %384 : vector<8x128xf32> to vector<1x8x128xf32>
    tpu.vector_store %arg4[%c33, %c0_152, %c0_153], %427 {strides = array<i32>} : memref<60x8x128xf32, #tpu.memory_space<vmem>>, vector<1x8x128xf32>,
    %c34 = arith.constant 34 : index
    %c0_154 = arith.constant 0 : index
    %c0_155 = arith.constant 0 : index
    %428 = vector.load %arg4[%c34, %c0_154, %c0_155] : memref<60x8x128xf32, #tpu.memory_space<vmem>>, vector<1x8x128xf32>
    %429 = vector.shape_cast %428 : vector<1x8x128xf32> to vector<8x128xf32>
    %430 = vector.shape_cast %390 : vector<8x128xf32> to vector<1x8x128xf32>
    tpu.vector_store %arg4[%c34, %c0_154, %c0_155], %430 {strides = array<i32>} : memref<60x8x128xf32, #tpu.memory_space<vmem>>, vector<1x8x128xf32>,
    %c35 = arith.constant 35 : index
    %c0_156 = arith.constant 0 : index
    %c0_157 = arith.constant 0 : index
    %431 = vector.load %arg4[%c35, %c0_156, %c0_157] : memref<60x8x128xf32, #tpu.memory_space<vmem>>, vector<1x8x128xf32>
    %432 = vector.shape_cast %431 : vector<1x8x128xf32> to vector<8x128xf32>
    %433 = vector.shape_cast %397 : vector<8x128xf32> to vector<1x8x128xf32>
    tpu.vector_store %arg4[%c35, %c0_156, %c0_157], %433 {strides = array<i32>} : memref<60x8x128xf32, #tpu.memory_space<vmem>>, vector<1x8x128xf32>,
    %c3_158 = arith.constant 3 : index
    %c0_159 = arith.constant 0 : index
    %c0_160 = arith.constant 0 : index
    %434 = vector.load %arg3[%c3_158, %c0_159, %c0_160] : memref<8x8x128xf32, #tpu.memory_space<vmem>>, vector<1x8x128xf32>
    %435 = vector.shape_cast %434 : vector<1x8x128xf32> to vector<8x128xf32>
    %436 = vector.broadcast %0 : f32 to vector<8x128xf32>
    %437 = arith.mulf %435, %436 : vector<8x128xf32>
    %c7_161 = arith.constant 7 : index
    %c0_162 = arith.constant 0 : index
    %c0_163 = arith.constant 0 : index
    %438 = vector.load %arg3[%c7_161, %c0_162, %c0_163] : memref<8x8x128xf32, #tpu.memory_space<vmem>>, vector<1x8x128xf32>
    %439 = vector.shape_cast %438 : vector<1x8x128xf32> to vector<8x128xf32>
    %440 = arith.addf %437, %439 : vector<8x128xf32>
    %441 = math.cos %440 : vector<8x128xf32>
    %442 = math.sin %440 : vector<8x128xf32>
    %c3_164 = arith.constant 3 : index
    %c0_165 = arith.constant 0 : index
    %443 = memref.load %arg2[%c3_164, %c0_165] : memref<4x12xf32, #tpu.memory_space<smem>>
    %c3_166 = arith.constant 3 : index
    %c1_167 = arith.constant 1 : index
    %444 = memref.load %arg2[%c3_166, %c1_167] : memref<4x12xf32, #tpu.memory_space<smem>>
    %c3_168 = arith.constant 3 : index
    %c2_169 = arith.constant 2 : index
    %445 = memref.load %arg2[%c3_168, %c2_169] : memref<4x12xf32, #tpu.memory_space<smem>>
    %c3_170 = arith.constant 3 : index
    %c3_171 = arith.constant 3 : index
    %446 = memref.load %arg2[%c3_170, %c3_171] : memref<4x12xf32, #tpu.memory_space<smem>>
    %c3_172 = arith.constant 3 : index
    %c4_173 = arith.constant 4 : index
    %447 = memref.load %arg2[%c3_172, %c4_173] : memref<4x12xf32, #tpu.memory_space<smem>>
    %c3_174 = arith.constant 3 : index
    %c5_175 = arith.constant 5 : index
    %448 = memref.load %arg2[%c3_174, %c5_175] : memref<4x12xf32, #tpu.memory_space<smem>>
    %c3_176 = arith.constant 3 : index
    %c6_177 = arith.constant 6 : index
    %449 = memref.load %arg2[%c3_176, %c6_177] : memref<4x12xf32, #tpu.memory_space<smem>>
    %450 = vector.broadcast %443 : f32 to vector<8x128xf32>
    %451 = arith.mulf %441, %450 : vector<8x128xf32>
    %452 = vector.broadcast %444 : f32 to vector<8x128xf32>
    %453 = arith.mulf %441, %452 : vector<8x128xf32>
    %454 = vector.broadcast %447 : f32 to vector<8x128xf32>
    %455 = arith.mulf %442, %454 : vector<8x128xf32>
    %456 = arith.subf %453, %455 : vector<8x128xf32>
    %457 = vector.broadcast %445 : f32 to vector<8x128xf32>
    %458 = arith.mulf %441, %457 : vector<8x128xf32>
    %459 = vector.broadcast %448 : f32 to vector<8x128xf32>
    %460 = arith.mulf %442, %459 : vector<8x128xf32>
    %461 = arith.subf %458, %460 : vector<8x128xf32>
    %462 = vector.broadcast %446 : f32 to vector<8x128xf32>
    %463 = arith.mulf %441, %462 : vector<8x128xf32>
    %464 = vector.broadcast %449 : f32 to vector<8x128xf32>
    %465 = arith.mulf %442, %464 : vector<8x128xf32>
    %466 = arith.subf %463, %465 : vector<8x128xf32>
    %467 = vector.broadcast %443 : f32 to vector<8x128xf32>
    %468 = arith.mulf %442, %467 : vector<8x128xf32>
    %469 = vector.broadcast %444 : f32 to vector<8x128xf32>
    %470 = arith.mulf %442, %469 : vector<8x128xf32>
    %471 = vector.broadcast %447 : f32 to vector<8x128xf32>
    %472 = arith.mulf %441, %471 : vector<8x128xf32>
    %473 = arith.addf %470, %472 : vector<8x128xf32>
    %474 = vector.broadcast %445 : f32 to vector<8x128xf32>
    %475 = arith.mulf %442, %474 : vector<8x128xf32>
    %476 = vector.broadcast %448 : f32 to vector<8x128xf32>
    %477 = arith.mulf %441, %476 : vector<8x128xf32>
    %478 = arith.addf %475, %477 : vector<8x128xf32>
    %479 = vector.broadcast %446 : f32 to vector<8x128xf32>
    %480 = arith.mulf %442, %479 : vector<8x128xf32>
    %481 = vector.broadcast %449 : f32 to vector<8x128xf32>
    %482 = arith.mulf %441, %481 : vector<8x128xf32>
    %483 = arith.addf %480, %482 : vector<8x128xf32>
    %c3_178 = arith.constant 3 : index
    %c7_179 = arith.constant 7 : index
    %484 = memref.load %arg2[%c3_178, %c7_179] : memref<4x12xf32, #tpu.memory_space<smem>>
    %c3_180 = arith.constant 3 : index
    %c8_181 = arith.constant 8 : index
    %485 = memref.load %arg2[%c3_180, %c8_181] : memref<4x12xf32, #tpu.memory_space<smem>>
    %c3_182 = arith.constant 3 : index
    %c9_183 = arith.constant 9 : index
    %486 = memref.load %arg2[%c3_182, %c9_183] : memref<4x12xf32, #tpu.memory_space<smem>>
    %c3_184 = arith.constant 3 : index
    %c10_185 = arith.constant 10 : index
    %487 = memref.load %arg2[%c3_184, %c10_185] : memref<4x12xf32, #tpu.memory_space<smem>>
    %488 = arith.mulf %328, %451 : vector<8x128xf32>
    %489 = arith.mulf %334, %468 : vector<8x128xf32>
    %490 = arith.addf %488, %489 : vector<8x128xf32>
    %491 = vector.broadcast %484 : f32 to vector<8x128xf32>
    %492 = arith.mulf %340, %491 : vector<8x128xf32>
    %493 = arith.addf %490, %492 : vector<8x128xf32>
    %494 = arith.mulf %328, %456 : vector<8x128xf32>
    %495 = arith.mulf %334, %473 : vector<8x128xf32>
    %496 = arith.addf %494, %495 : vector<8x128xf32>
    %497 = vector.broadcast %485 : f32 to vector<8x128xf32>
    %498 = arith.mulf %340, %497 : vector<8x128xf32>
    %499 = arith.addf %496, %498 : vector<8x128xf32>
    %500 = arith.mulf %328, %461 : vector<8x128xf32>
    %501 = arith.mulf %334, %478 : vector<8x128xf32>
    %502 = arith.addf %500, %501 : vector<8x128xf32>
    %503 = vector.broadcast %486 : f32 to vector<8x128xf32>
    %504 = arith.mulf %340, %503 : vector<8x128xf32>
    %505 = arith.addf %502, %504 : vector<8x128xf32>
    %506 = arith.mulf %328, %466 : vector<8x128xf32>
    %507 = arith.mulf %334, %483 : vector<8x128xf32>
    %508 = arith.addf %506, %507 : vector<8x128xf32>
    %509 = vector.broadcast %487 : f32 to vector<8x128xf32>
    %510 = arith.mulf %340, %509 : vector<8x128xf32>
    %511 = arith.addf %508, %510 : vector<8x128xf32>
    %512 = arith.addf %511, %347 : vector<8x128xf32>
    %513 = arith.mulf %353, %451 : vector<8x128xf32>
    %514 = arith.mulf %359, %468 : vector<8x128xf32>
    %515 = arith.addf %513, %514 : vector<8x128xf32>
    %516 = vector.broadcast %484 : f32 to vector<8x128xf32>
    %517 = arith.mulf %365, %516 : vector<8x128xf32>
    %518 = arith.addf %515, %517 : vector<8x128xf32>
    %519 = arith.mulf %353, %456 : vector<8x128xf32>
    %520 = arith.mulf %359, %473 : vector<8x128xf32>
    %521 = arith.addf %519, %520 : vector<8x128xf32>
    %522 = vector.broadcast %485 : f32 to vector<8x128xf32>
    %523 = arith.mulf %365, %522 : vector<8x128xf32>
    %524 = arith.addf %521, %523 : vector<8x128xf32>
    %525 = arith.mulf %353, %461 : vector<8x128xf32>
    %526 = arith.mulf %359, %478 : vector<8x128xf32>
    %527 = arith.addf %525, %526 : vector<8x128xf32>
    %528 = vector.broadcast %486 : f32 to vector<8x128xf32>
    %529 = arith.mulf %365, %528 : vector<8x128xf32>
    %530 = arith.addf %527, %529 : vector<8x128xf32>
    %531 = arith.mulf %353, %466 : vector<8x128xf32>
    %532 = arith.mulf %359, %483 : vector<8x128xf32>
    %533 = arith.addf %531, %532 : vector<8x128xf32>
    %534 = vector.broadcast %487 : f32 to vector<8x128xf32>
    %535 = arith.mulf %365, %534 : vector<8x128xf32>
    %536 = arith.addf %533, %535 : vector<8x128xf32>
    %537 = arith.addf %536, %372 : vector<8x128xf32>
    %538 = arith.mulf %378, %451 : vector<8x128xf32>
    %539 = arith.mulf %384, %468 : vector<8x128xf32>
    %540 = arith.addf %538, %539 : vector<8x128xf32>
    %541 = vector.broadcast %484 : f32 to vector<8x128xf32>
    %542 = arith.mulf %390, %541 : vector<8x128xf32>
    %543 = arith.addf %540, %542 : vector<8x128xf32>
    %544 = arith.mulf %378, %456 : vector<8x128xf32>
    %545 = arith.mulf %384, %473 : vector<8x128xf32>
    %546 = arith.addf %544, %545 : vector<8x128xf32>
    %547 = vector.broadcast %485 : f32 to vector<8x128xf32>
    %548 = arith.mulf %390, %547 : vector<8x128xf32>
    %549 = arith.addf %546, %548 : vector<8x128xf32>
    %550 = arith.mulf %378, %461 : vector<8x128xf32>
    %551 = arith.mulf %384, %478 : vector<8x128xf32>
    %552 = arith.addf %550, %551 : vector<8x128xf32>
    %553 = vector.broadcast %486 : f32 to vector<8x128xf32>
    %554 = arith.mulf %390, %553 : vector<8x128xf32>
    %555 = arith.addf %552, %554 : vector<8x128xf32>
    %556 = arith.mulf %378, %466 : vector<8x128xf32>
    %557 = arith.mulf %384, %483 : vector<8x128xf32>
    %558 = arith.addf %556, %557 : vector<8x128xf32>
    %559 = vector.broadcast %487 : f32 to vector<8x128xf32>
    %560 = arith.mulf %390, %559 : vector<8x128xf32>
    %561 = arith.addf %558, %560 : vector<8x128xf32>
    %562 = arith.addf %561, %397 : vector<8x128xf32>
    %c36 = arith.constant 36 : index
    %c0_186 = arith.constant 0 : index
    %c0_187 = arith.constant 0 : index
    %563 = vector.load %arg4[%c36, %c0_186, %c0_187] : memref<60x8x128xf32, #tpu.memory_space<vmem>>, vector<1x8x128xf32>
    %564 = vector.shape_cast %563 : vector<1x8x128xf32> to vector<8x128xf32>
    %565 = vector.shape_cast %493 : vector<8x128xf32> to vector<1x8x128xf32>
    tpu.vector_store %arg4[%c36, %c0_186, %c0_187], %565 {strides = array<i32>} : memref<60x8x128xf32, #tpu.memory_space<vmem>>, vector<1x8x128xf32>,
    %c37 = arith.constant 37 : index
    %c0_188 = arith.constant 0 : index
    %c0_189 = arith.constant 0 : index
    %566 = vector.load %arg4[%c37, %c0_188, %c0_189] : memref<60x8x128xf32, #tpu.memory_space<vmem>>, vector<1x8x128xf32>
    %567 = vector.shape_cast %566 : vector<1x8x128xf32> to vector<8x128xf32>
    %568 = vector.shape_cast %499 : vector<8x128xf32> to vector<1x8x128xf32>
    tpu.vector_store %arg4[%c37, %c0_188, %c0_189], %568 {strides = array<i32>} : memref<60x8x128xf32, #tpu.memory_space<vmem>>, vector<1x8x128xf32>,
    %c38 = arith.constant 38 : index
    %c0_190 = arith.constant 0 : index
    %c0_191 = arith.constant 0 : index
    %569 = vector.load %arg4[%c38, %c0_190, %c0_191] : memref<60x8x128xf32, #tpu.memory_space<vmem>>, vector<1x8x128xf32>
    %570 = vector.shape_cast %569 : vector<1x8x128xf32> to vector<8x128xf32>
    %571 = vector.shape_cast %505 : vector<8x128xf32> to vector<1x8x128xf32>
    tpu.vector_store %arg4[%c38, %c0_190, %c0_191], %571 {strides = array<i32>} : memref<60x8x128xf32, #tpu.memory_space<vmem>>, vector<1x8x128xf32>,
    %c39 = arith.constant 39 : index
    %c0_192 = arith.constant 0 : index
    %c0_193 = arith.constant 0 : index
    %572 = vector.load %arg4[%c39, %c0_192, %c0_193] : memref<60x8x128xf32, #tpu.memory_space<vmem>>, vector<1x8x128xf32>
    %573 = vector.shape_cast %572 : vector<1x8x128xf32> to vector<8x128xf32>
    %574 = vector.shape_cast %512 : vector<8x128xf32> to vector<1x8x128xf32>
    tpu.vector_store %arg4[%c39, %c0_192, %c0_193], %574 {strides = array<i32>} : memref<60x8x128xf32, #tpu.memory_space<vmem>>, vector<1x8x128xf32>,
    %c40 = arith.constant 40 : index
    %c0_194 = arith.constant 0 : index
    %c0_195 = arith.constant 0 : index
    %575 = vector.load %arg4[%c40, %c0_194, %c0_195] : memref<60x8x128xf32, #tpu.memory_space<vmem>>, vector<1x8x128xf32>
    %576 = vector.shape_cast %575 : vector<1x8x128xf32> to vector<8x128xf32>
    %577 = vector.shape_cast %518 : vector<8x128xf32> to vector<1x8x128xf32>
    tpu.vector_store %arg4[%c40, %c0_194, %c0_195], %577 {strides = array<i32>} : memref<60x8x128xf32, #tpu.memory_space<vmem>>, vector<1x8x128xf32>,
    %c41 = arith.constant 41 : index
    %c0_196 = arith.constant 0 : index
    %c0_197 = arith.constant 0 : index
    %578 = vector.load %arg4[%c41, %c0_196, %c0_197] : memref<60x8x128xf32, #tpu.memory_space<vmem>>, vector<1x8x128xf32>
    %579 = vector.shape_cast %578 : vector<1x8x128xf32> to vector<8x128xf32>
    %580 = vector.shape_cast %524 : vector<8x128xf32> to vector<1x8x128xf32>
    tpu.vector_store %arg4[%c41, %c0_196, %c0_197], %580 {strides = array<i32>} : memref<60x8x128xf32, #tpu.memory_space<vmem>>, vector<1x8x128xf32>,
    %c42 = arith.constant 42 : index
    %c0_198 = arith.constant 0 : index
    %c0_199 = arith.constant 0 : index
    %581 = vector.load %arg4[%c42, %c0_198, %c0_199] : memref<60x8x128xf32, #tpu.memory_space<vmem>>, vector<1x8x128xf32>
    %582 = vector.shape_cast %581 : vector<1x8x128xf32> to vector<8x128xf32>
    %583 = vector.shape_cast %530 : vector<8x128xf32> to vector<1x8x128xf32>
    tpu.vector_store %arg4[%c42, %c0_198, %c0_199], %583 {strides = array<i32>} : memref<60x8x128xf32, #tpu.memory_space<vmem>>, vector<1x8x128xf32>,
    %c43 = arith.constant 43 : index
    %c0_200 = arith.constant 0 : index
    %c0_201 = arith.constant 0 : index
    %584 = vector.load %arg4[%c43, %c0_200, %c0_201] : memref<60x8x128xf32, #tpu.memory_space<vmem>>, vector<1x8x128xf32>
    %585 = vector.shape_cast %584 : vector<1x8x128xf32> to vector<8x128xf32>
    %586 = vector.shape_cast %537 : vector<8x128xf32> to vector<1x8x128xf32>
    tpu.vector_store %arg4[%c43, %c0_200, %c0_201], %586 {strides = array<i32>} : memref<60x8x128xf32, #tpu.memory_space<vmem>>, vector<1x8x128xf32>,
    %c44 = arith.constant 44 : index
    %c0_202 = arith.constant 0 : index
    %c0_203 = arith.constant 0 : index
    %587 = vector.load %arg4[%c44, %c0_202, %c0_203] : memref<60x8x128xf32, #tpu.memory_space<vmem>>, vector<1x8x128xf32>
    %588 = vector.shape_cast %587 : vector<1x8x128xf32> to vector<8x128xf32>
    %589 = vector.shape_cast %543 : vector<8x128xf32> to vector<1x8x128xf32>
    tpu.vector_store %arg4[%c44, %c0_202, %c0_203], %589 {strides = array<i32>} : memref<60x8x128xf32, #tpu.memory_space<vmem>>, vector<1x8x128xf32>,
    %c45 = arith.constant 45 : index
    %c0_204 = arith.constant 0 : index
    %c0_205 = arith.constant 0 : index
    %590 = vector.load %arg4[%c45, %c0_204, %c0_205] : memref<60x8x128xf32, #tpu.memory_space<vmem>>, vector<1x8x128xf32>
    %591 = vector.shape_cast %590 : vector<1x8x128xf32> to vector<8x128xf32>
    %592 = vector.shape_cast %549 : vector<8x128xf32> to vector<1x8x128xf32>
    tpu.vector_store %arg4[%c45, %c0_204, %c0_205], %592 {strides = array<i32>} : memref<60x8x128xf32, #tpu.memory_space<vmem>>, vector<1x8x128xf32>,
    %c46 = arith.constant 46 : index
    %c0_206 = arith.constant 0 : index
    %c0_207 = arith.constant 0 : index
    %593 = vector.load %arg4[%c46, %c0_206, %c0_207] : memref<60x8x128xf32, #tpu.memory_space<vmem>>, vector<1x8x128xf32>
    %594 = vector.shape_cast %593 : vector<1x8x128xf32> to vector<8x128xf32>
    %595 = vector.shape_cast %555 : vector<8x128xf32> to vector<1x8x128xf32>
    tpu.vector_store %arg4[%c46, %c0_206, %c0_207], %595 {strides = array<i32>} : memref<60x8x128xf32, #tpu.memory_space<vmem>>, vector<1x8x128xf32>,
    %c47 = arith.constant 47 : index
    %c0_208 = arith.constant 0 : index
    %c0_209 = arith.constant 0 : index
    %596 = vector.load %arg4[%c47, %c0_208, %c0_209] : memref<60x8x128xf32, #tpu.memory_space<vmem>>, vector<1x8x128xf32>
    %597 = vector.shape_cast %596 : vector<1x8x128xf32> to vector<8x128xf32>
    %598 = vector.shape_cast %562 : vector<8x128xf32> to vector<1x8x128xf32>
    tpu.vector_store %arg4[%c47, %c0_208, %c0_209], %598 {strides = array<i32>} : memref<60x8x128xf32, #tpu.memory_space<vmem>>, vector<1x8x128xf32>,
    %c48 = arith.constant 48 : index
    %c0_210 = arith.constant 0 : index
    %c0_211 = arith.constant 0 : index
    %599 = vector.load %arg4[%c48, %c0_210, %c0_211] : memref<60x8x128xf32, #tpu.memory_space<vmem>>, vector<1x8x128xf32>
    %600 = vector.shape_cast %599 : vector<1x8x128xf32> to vector<8x128xf32>
    %601 = vector.shape_cast %493 : vector<8x128xf32> to vector<1x8x128xf32>
    tpu.vector_store %arg4[%c48, %c0_210, %c0_211], %601 {strides = array<i32>} : memref<60x8x128xf32, #tpu.memory_space<vmem>>, vector<1x8x128xf32>,
    %c49 = arith.constant 49 : index
    %c0_212 = arith.constant 0 : index
    %c0_213 = arith.constant 0 : index
    %602 = vector.load %arg4[%c49, %c0_212, %c0_213] : memref<60x8x128xf32, #tpu.memory_space<vmem>>, vector<1x8x128xf32>
    %603 = vector.shape_cast %602 : vector<1x8x128xf32> to vector<8x128xf32>
    %604 = vector.shape_cast %499 : vector<8x128xf32> to vector<1x8x128xf32>
    tpu.vector_store %arg4[%c49, %c0_212, %c0_213], %604 {strides = array<i32>} : memref<60x8x128xf32, #tpu.memory_space<vmem>>, vector<1x8x128xf32>,
    %c50 = arith.constant 50 : index
    %c0_214 = arith.constant 0 : index
    %c0_215 = arith.constant 0 : index
    %605 = vector.load %arg4[%c50, %c0_214, %c0_215] : memref<60x8x128xf32, #tpu.memory_space<vmem>>, vector<1x8x128xf32>
    %606 = vector.shape_cast %605 : vector<1x8x128xf32> to vector<8x128xf32>
    %607 = vector.shape_cast %505 : vector<8x128xf32> to vector<1x8x128xf32>
    tpu.vector_store %arg4[%c50, %c0_214, %c0_215], %607 {strides = array<i32>} : memref<60x8x128xf32, #tpu.memory_space<vmem>>, vector<1x8x128xf32>,
    %c51 = arith.constant 51 : index
    %c0_216 = arith.constant 0 : index
    %c0_217 = arith.constant 0 : index
    %608 = vector.load %arg4[%c51, %c0_216, %c0_217] : memref<60x8x128xf32, #tpu.memory_space<vmem>>, vector<1x8x128xf32>
    %609 = vector.shape_cast %608 : vector<1x8x128xf32> to vector<8x128xf32>
    %610 = vector.shape_cast %512 : vector<8x128xf32> to vector<1x8x128xf32>
    tpu.vector_store %arg4[%c51, %c0_216, %c0_217], %610 {strides = array<i32>} : memref<60x8x128xf32, #tpu.memory_space<vmem>>, vector<1x8x128xf32>,
    %c52 = arith.constant 52 : index
    %c0_218 = arith.constant 0 : index
    %c0_219 = arith.constant 0 : index
    %611 = vector.load %arg4[%c52, %c0_218, %c0_219] : memref<60x8x128xf32, #tpu.memory_space<vmem>>, vector<1x8x128xf32>
    %612 = vector.shape_cast %611 : vector<1x8x128xf32> to vector<8x128xf32>
    %613 = vector.shape_cast %518 : vector<8x128xf32> to vector<1x8x128xf32>
    tpu.vector_store %arg4[%c52, %c0_218, %c0_219], %613 {strides = array<i32>} : memref<60x8x128xf32, #tpu.memory_space<vmem>>, vector<1x8x128xf32>,
    %c53 = arith.constant 53 : index
    %c0_220 = arith.constant 0 : index
    %c0_221 = arith.constant 0 : index
    %614 = vector.load %arg4[%c53, %c0_220, %c0_221] : memref<60x8x128xf32, #tpu.memory_space<vmem>>, vector<1x8x128xf32>
    %615 = vector.shape_cast %614 : vector<1x8x128xf32> to vector<8x128xf32>
    %616 = vector.shape_cast %524 : vector<8x128xf32> to vector<1x8x128xf32>
    tpu.vector_store %arg4[%c53, %c0_220, %c0_221], %616 {strides = array<i32>} : memref<60x8x128xf32, #tpu.memory_space<vmem>>, vector<1x8x128xf32>,
    %c54 = arith.constant 54 : index
    %c0_222 = arith.constant 0 : index
    %c0_223 = arith.constant 0 : index
    %617 = vector.load %arg4[%c54, %c0_222, %c0_223] : memref<60x8x128xf32, #tpu.memory_space<vmem>>, vector<1x8x128xf32>
    %618 = vector.shape_cast %617 : vector<1x8x128xf32> to vector<8x128xf32>
    %619 = vector.shape_cast %530 : vector<8x128xf32> to vector<1x8x128xf32>
    tpu.vector_store %arg4[%c54, %c0_222, %c0_223], %619 {strides = array<i32>} : memref<60x8x128xf32, #tpu.memory_space<vmem>>, vector<1x8x128xf32>,
    %c55 = arith.constant 55 : index
    %c0_224 = arith.constant 0 : index
    %c0_225 = arith.constant 0 : index
    %620 = vector.load %arg4[%c55, %c0_224, %c0_225] : memref<60x8x128xf32, #tpu.memory_space<vmem>>, vector<1x8x128xf32>
    %621 = vector.shape_cast %620 : vector<1x8x128xf32> to vector<8x128xf32>
    %622 = vector.shape_cast %537 : vector<8x128xf32> to vector<1x8x128xf32>
    tpu.vector_store %arg4[%c55, %c0_224, %c0_225], %622 {strides = array<i32>} : memref<60x8x128xf32, #tpu.memory_space<vmem>>, vector<1x8x128xf32>,
    %c56 = arith.constant 56 : index
    %c0_226 = arith.constant 0 : index
    %c0_227 = arith.constant 0 : index
    %623 = vector.load %arg4[%c56, %c0_226, %c0_227] : memref<60x8x128xf32, #tpu.memory_space<vmem>>, vector<1x8x128xf32>
    %624 = vector.shape_cast %623 : vector<1x8x128xf32> to vector<8x128xf32>
    %625 = vector.shape_cast %543 : vector<8x128xf32> to vector<1x8x128xf32>
    tpu.vector_store %arg4[%c56, %c0_226, %c0_227], %625 {strides = array<i32>} : memref<60x8x128xf32, #tpu.memory_space<vmem>>, vector<1x8x128xf32>,
    %c57 = arith.constant 57 : index
    %c0_228 = arith.constant 0 : index
    %c0_229 = arith.constant 0 : index
    %626 = vector.load %arg4[%c57, %c0_228, %c0_229] : memref<60x8x128xf32, #tpu.memory_space<vmem>>, vector<1x8x128xf32>
    %627 = vector.shape_cast %626 : vector<1x8x128xf32> to vector<8x128xf32>
    %628 = vector.shape_cast %549 : vector<8x128xf32> to vector<1x8x128xf32>
    tpu.vector_store %arg4[%c57, %c0_228, %c0_229], %628 {strides = array<i32>} : memref<60x8x128xf32, #tpu.memory_space<vmem>>, vector<1x8x128xf32>,
    %c58 = arith.constant 58 : index
    %c0_230 = arith.constant 0 : index
    %c0_231 = arith.constant 0 : index
    %629 = vector.load %arg4[%c58, %c0_230, %c0_231] : memref<60x8x128xf32, #tpu.memory_space<vmem>>, vector<1x8x128xf32>
    %630 = vector.shape_cast %629 : vector<1x8x128xf32> to vector<8x128xf32>
    %631 = vector.shape_cast %555 : vector<8x128xf32> to vector<1x8x128xf32>
    tpu.vector_store %arg4[%c58, %c0_230, %c0_231], %631 {strides = array<i32>} : memref<60x8x128xf32, #tpu.memory_space<vmem>>, vector<1x8x128xf32>,
    %c59 = arith.constant 59 : index
    %c0_232 = arith.constant 0 : index
    %c0_233 = arith.constant 0 : index
    %632 = vector.load %arg4[%c59, %c0_232, %c0_233] : memref<60x8x128xf32, #tpu.memory_space<vmem>>, vector<1x8x128xf32>
    %633 = vector.shape_cast %632 : vector<1x8x128xf32> to vector<8x128xf32>
    %634 = vector.shape_cast %562 : vector<8x128xf32> to vector<1x8x128xf32>
    tpu.vector_store %arg4[%c59, %c0_232, %c0_233], %634 {strides = array<i32>} : memref<60x8x128xf32, #tpu.memory_space<vmem>>, vector<1x8x128xf32>,
    return
  }
  func.func @transform_0(%arg0: i32) -> (i32, i32) {
    %c0_i32 = arith.constant 0 : i32
    %c0_i32_0 = arith.constant 0 : i32
    %c0_i32_1 = arith.constant 0 : i32
    return %c0_i32, %c0_i32_0 : i32, i32
  }
  func.func @transform_1(%arg0: i32) -> (i32, i32) {
    %c0_i32 = arith.constant 0 : i32
    %c0_i32_0 = arith.constant 0 : i32
    %c0_i32_1 = arith.constant 0 : i32
    return %c0_i32, %c0_i32_0 : i32, i32
  }
  func.func @transform_2(%arg0: i32) -> (i32, i32, i32) {
    %c0_i32 = arith.constant 0 : i32
    %c0_i32_0 = arith.constant 0 : i32
    %c0_i32_1 = arith.constant 0 : i32
    return %c0_i32, %c0_i32_0, %arg0 : i32, i32, i32
  }
  func.func @transform_3(%arg0: i32) -> (i32, i32, i32) {
    %c0_i32 = arith.constant 0 : i32
    %c0_i32_0 = arith.constant 0 : i32
    %c0_i32_1 = arith.constant 0 : i32
    return %c0_i32, %c0_i32_0, %arg0 : i32, i32, i32
  }
}

</mosaic_0001>

<llo_original>
// kernel: tpu_custom_call.1
$region0: #{tpu_custom_call.1}
  #allocation0 [shape = 'u32[]', space=smem, size = 0x4, offset = 0x4, fixed_abs, tag = 'smem constant byte address 0x4 - core index']
  #allocation1 [shape = 'u32[72,128]{1,0:T(1,128)}', space=vmem, size = 0x9000, scoped, tag = 'internal scratch']
  #allocation2 [shape = 'f32[1,1]{1,0:T(1,128)S(6)}', space=smem, size = 0x200, scoped, tag = 'scoped memory for tpu_custom_call.1']
  %s0 = inlined_call_operand.<no memory space> [shape: f32[1,1], index: 0, kind: input, shape index: {}]
  %s1 = inlined_call_operand.hbm [shape: f32[4,12], index: 1, kind: input, shape index: {}]
  %s2 = inlined_call_operand.hbm [shape: f32[8,8,128], index: 2, kind: input, shape index: {}]
  %s3 = inlined_call_operand.hbm [shape: f32[60,8,128], index: 3, kind: output, shape index: {}]
  %s4 = sld [smem:[#allocation0]]
  $region30: #{tpu_custom_call.1} parent=0
    _
  %s6 = ssub.s32 1, %s4
  %s7 = scalar_select 0, %s6, %s4
  %8 = sst [smem:[#allocation2]] %s0
  $region1: #{tpu_custom_call.1} parent=0
    #allocation3 [shape = 'u8[2048]{0}', space=smem, size = 0x800, scoped, tag = 'input window, operand 1, single buffered']
    #allocation4 [shape = 's32[1]{0}', space=sflag, size = 0x4, scoped, tag = 'scoped memory for tpu_custom_call.1']
    #allocation5 [shape = 's32[1]{0}', space=sflag, size = 0x4, scoped, tag = 'scoped memory for tpu_custom_call.1']
    #allocation6 [shape = 's32[1]{0}', space=sflag, size = 0x4, scoped, tag = 'scoped memory for tpu_custom_call.1']
    #allocation7 [shape = 'u8[32768]{0}', space=vmem, size = 0x8000, scoped, tag = 'input window, operand 2, single buffered']
    #allocation8 [shape = 'u8[245760]{0}', space=vmem, size = 0x3c000, scoped, tag = 'output window, operand 0, single buffered']
    %9 = vsyncpa [#allocation6], 0
    %10 = vsyncpa [#allocation4], 0
    %11 = vsyncpa [#allocation5], 0
    // Predicated region
    $region2: #{tpu_custom_call.1} parent=1 // pred_check
      _
    $region3: #{tpu_custom_call.1} parent=1 // pred_check_branch
      %13 = sbr.rel (0) target = $region5
    $region4: #{tpu_custom_call.1} parent=1 // pred_region
      _
    $region5: #{tpu_custom_call.1} parent=1 // pred_fallthru
      _
    // Predicated region
    $region6: #{tpu_custom_call.1} parent=1 // pred_check
      _
    $region7: #{tpu_custom_call.1} parent=1 // pred_check_branch
      %15 = sbr.rel (0) target = $region9
    $region8: #{tpu_custom_call.1} parent=1 // pred_region
      %17 = vsyncadd [#allocation6], 0
      %s19 = sshll.u32 %s1, 4
      %s20 = int_to_ptr.hbm [resolvable:$true] %s19
      %22 = dma.hbm_to_smem %s20, 64, [#allocation3], [#allocation6]
    $region9: #{tpu_custom_call.1} parent=1 // pred_fallthru
      _
    // Predicated region
    $region10: #{tpu_custom_call.1} parent=1 // pred_check
      _
    $region11: #{tpu_custom_call.1} parent=1 // pred_check_branch
      %24 = sbr.rel (0) target = $region13
    $region12: #{tpu_custom_call.1} parent=1 // pred_region
      %26 = vsyncadd [#allocation4], 0
      %s27 = sshll.u32 %s2, 4
      %s28 = int_to_ptr.hbm [resolvable:$true] %s27
      %s29 = sshll.u32 [#allocation7], 4
      %s30 = int_to_ptr.vmem [resolvable:$true] %s29
      %35 = dma.hbm_to_vmem [thread:$0]  %s28, 1024, %s30, [#allocation4], 128, 128, 8
    $region13: #{tpu_custom_call.1} parent=1 // pred_fallthru
      _
    // Predicated region
    $region14: #{tpu_custom_call.1} parent=1 // pred_check
      _
    $region15: #{tpu_custom_call.1} parent=1 // pred_check_branch
      %37 = sbr.rel (0) target = $region17
    $region16: #{tpu_custom_call.1} parent=1 // pred_region
      %39 = dma.done [#allocation6], 64
    $region17: #{tpu_custom_call.1} parent=1 // pred_fallthru
      _
    // Predicated region
    $region18: #{tpu_custom_call.1} parent=1 // pred_check
      _
    $region19: #{tpu_custom_call.1} parent=1 // pred_check_branch
      %41 = sbr.rel (0) target = $region21
    $region20: #{tpu_custom_call.1} parent=1 // pred_region
      %43 = dma.done [#allocation4], 1024
    $region21: #{tpu_custom_call.1} parent=1 // pred_fallthru
      _
    %44 = sfence
    %s45 = sld [smem:[#allocation2]]
    %v46 = vld [vmem:[#allocation7] sm:$0xff]
    %v47 = vstv %s45
    %v48 = vmul.f32 %v46, %v47
    %s49 = scalar_lea.vmem [#allocation7], 32
    %v50 = vld [vmem:[%s49] sm:$0xff]
    %v51 = vadd.f32 %v48, %v50
    %v52 = vand.u32 2147483647, %v51
    %vm53 = vcmp.le.f32.partialorder %v52, 0.7853982
    %vm54 = vcmp.lt.s32.totalorder %v51, 0
    %v55 = vand.u32 %v51, 2139095040
    %v56 = vshrl.u32 %v55, 23
    %v57 = vsub.s32 %v56, 127
    %v58 = vand.u32 2147483647, %v51
    %v59 = vand.u32 %v58, 8388607
    %v60 = vor.u32 %v59, 8388608
    %v61 = vsub.s32 0, %v60
    %v62 = vadd.s32 %v57, 1
    %vm63 = vcmp.gt.s32.totalorder %v62, 0
    %v64 = vsel %vm63, %v62, 0
    %v65 = vshrl.u32 %v64, 5
    %v66 = vand.u32 %v64, 31
    %v67 = vsub.s32 32, %v66
    %v68 = vshrl.u32 683565275, %v67
    %v69 = vshll.u32 683565275, %v66
    %v70 = vshrl.u32 2475754826, %v67
    %v71 = vor.u32 %v69, %v70
    %v72 = vshll.u32 2475754826, %v66
    %v73 = vshrl.u32 2131351028, %v67
    %v74 = vor.u32 %v72, %v73
    %v75 = vshll.u32 2131351028, %v66
    %v76 = vshrl.u32 2102212464, %v67
    %v77 = vor.u32 %v75, %v76
    %v78 = vshll.u32 2102212464, %v66
    %v79 = vshrl.u32 920167782, %v67
    %v80 = vor.u32 %v78, %v79
    %v81 = vshll.u32 920167782, %v66
    %v82 = vshrl.u32 1326507024, %v67
    %v83 = vor.u32 %v81, %v82
    %vm84 = vcmp.lt.s32.totalorder %v65, 1
    %vm85 = vcmp.lt.s32.totalorder %v65, 2
    %vm86 = vcmp.lt.s32.totalorder %v65, 3
    %vm87 = vcmp.lt.s32.totalorder %v65, 4
    %v88 = vsel %vm84, %v68, %v71
    %v89 = vsel %vm87, %v77, 2102212464
    %v90 = vsel %vm86, %v74, %v89
    %v91 = vsel %vm85, %v88, %v90
    %v92 = vsel %vm84, %v71, %v74
    %v93 = vsel %vm87, %v80, 920167782
    %v94 = vsel %vm86, %v77, %v93
    %v95 = vsel %vm85, %v92, %v94
    %v96 = vsel %vm84, %v74, %v77
    %v97 = vsel %vm87, %v83, 1326507024
    %v98 = vsel %vm86, %v80, %v97
    %v99 = vsel %vm85, %v96, %v98
    %v100 = vshll.u32 %v60, 8
    %v101 = vand.u32 %v100, 65535
    %v102 = vshrl.u32 %v100, 16
    %v103 = vand.u32 %v99, 65535
    %v104 = vshrl.u32 %v99, 16
    %v105 = vmul.u32 %v101, %v103
    %v106 = vmul.u32 %v101, %v104
    %v107 = vmul.u32 %v102, %v103
    %v108 = vmul.u32 %v102, %v104
    %v109 = vshll.u32 %v106, 16
    %v110 = vshrl.u32 %v106, 16
    %v111 = vshll.u32 %v107, 16
    %v112 = vshrl.u32 %v107, 16
    %vm113 = vc.u32 %v105, %v109
    %v114 = vsel %vm113, 1, 0
    %v115 = vadd.s32 %v105, %v109
    %v116 = vadd.s32 %v108, %v114
    %vm117 = vc.u32 %v115, %v111
    %v118 = vsel %vm117, 1, 0
    %v119 = vadd.s32 %v115, %v111
    %v120 = vadd.s32 %v116, %v118
    %v121 = vadd.s32 %v120, %v110
    %v122 = vadd.s32 %v121, %v112
    %v123 = vand.u32 %v100, 65535
    %v124 = vshrl.u32 %v100, 16
    %v125 = vand.u32 %v95, 65535
    %v126 = vshrl.u32 %v95, 16
    %v127 = vmul.u32 %v123, %v125
    %v128 = vmul.u32 %v123, %v126
    %v129 = vmul.u32 %v124, %v125
    %v130 = vmul.u32 %v124, %v126
    %v131 = vshll.u32 %v128, 16
    %v132 = vshrl.u32 %v128, 16
    %v133 = vshll.u32 %v129, 16
    %v134 = vshrl.u32 %v129, 16
    %vm135 = vc.u32 %v127, %v131
    %v136 = vsel %vm135, 1, 0
    %v137 = vadd.s32 %v127, %v131
    %v138 = vadd.s32 %v130, %v136
    %vm139 = vc.u32 %v137, %v133
    %v140 = vsel %vm139, 1, 0
    %v141 = vadd.s32 %v137, %v133
    %v142 = vadd.s32 %v138, %v140
    %v143 = vadd.s32 %v142, %v132
    %v144 = vadd.s32 %v143, %v134
    %v145 = vmul.u32 %v100, %v91
    %v146 = vadd.s32 %v122, %v141
    %vm147 = vc.u32 %v122, %v141
    %v148 = vadd.s32 %v144, 1
    %v149 = vsel %vm147, %v148, %v144
    %v150 = vadd.s32 %v145, %v149
    %v151 = vadd.s32 %v150, 536870912
    %v152 = vshrl.u32 %v151, 30
    %v153 = vshll.u32 %v152, 30
    %v154 = vsub.s32 %v150, %v153
    %vm155 = vcmp.lt.s32.totalorder %v154, 0
    %v156 = vsub.s32 0, %v154
    %v157 = vsel %vm155, %v156, %v154
    %v158 = vclz %v157
    %v159 = vsub.s32 %v158, 2
    %vm160 = vcmp.gt.s32.totalorder 0, %v159
    %v161 = vsel %vm160, 0, %v159
    %v162 = vsub.s32 32, %v161
    %v163 = vshll.u32 %v154, %v161
    %v164 = vshrl.u32 %v146, %v162
    %v165 = vor.u32 %v163, %v164
    %v166 = vsub.s32 4294967266, %v161
    %v167 = vadd.s32 %v166, 127
    %v168 = vshll.u32 %v167, 23
    %v169 = vor.u32 4788187, %v168
    %v170 = vand.u32 2147483647, %v169
    %v172 = vcvt.s32.f32 %v165
    %v173 = vmul.f32 %v172, %v170
    %v174 = vxor.u32 %v173, 2147483648
    %v175 = vsel %vm54, %v174, %v173
    %v176 = vsub.s32 4, %v152
    %v177 = vsel %vm54, %v176, %v152
    %v178 = vsel %vm53, %v51, %v175
    %v179 = vsel %vm53, 0, %v177
    %v180 = vmul.f32 %v178, %v178
    %v181 = vmul.f32 %v180, -0.001358992
    %v182 = vadd.f32 %v181, 0.041655596
    %v183 = vmul.f32 %v180, %v182
    %v184 = vadd.f32 %v183, -0.4999988
    %v185 = vmul.f32 %v180, %v184
    %v186 = vadd.f32 1.0, %v185
    %v187 = vmul.f32 %v178, %v178
    %v188 = vmul.f32 %v187, -0.00019511016
    %v189 = vadd.f32 %v188, 0.008332121
    %v190 = vmul.f32 %v187, %v189
    %v191 = vadd.f32 %v190, -0.16666654
    %v192 = vmul.f32 %v187, %v191
    %v193 = vadd.f32 %v192, 1.0
    %v194 = vmul.f32 %v193, %v178
    %vm195 = vweird.f32 %v51
    %v196 = vand.u32 %v179, 3
    %vm197 = vcmp.lt.s32.totalorder %v196, 2
    %vm198 = vcmp.eq.s32.totalorder %v196, 0
    %v199 = vxor.u32 %v194, 2147483648
    %v200 = vsel %vm198, %v186, %v199
    %vm201 = vcmp.eq.s32.totalorder %v196, 2
    %v202 = vxor.u32 %v186, 2147483648
    %v203 = vsel %vm201, %v202, %v194
    %v204 = vsel %vm197, %v200, %v203
    %v205 = vsel %vm195, nan, %v204
    %v206 = vand.u32 2147483647, %v51
    %vm207 = vcmp.le.f32.partialorder %v206, 0.7853982
    %vm208 = vcmp.lt.s32.totalorder %v51, 0
    %v209 = vand.u32 %v51, 2139095040
    %v210 = vshrl.u32 %v209, 23
    %v211 = vsub.s32 %v210, 127
    %v212 = vand.u32 2147483647, %v51
    %v213 = vand.u32 %v212, 8388607
    %v214 = vor.u32 %v213, 8388608
    %v215 = vsub.s32 0, %v214
    %v216 = vadd.s32 %v211, 1
    %vm217 = vcmp.gt.s32.totalorder %v216, 0
    %v218 = vsel %vm217, %v216, 0
    %v219 = vshrl.u32 %v218, 5
    %v220 = vand.u32 %v218, 31
    %v221 = vsub.s32 32, %v220
    %v222 = vshrl.u32 683565275, %v221
    %v223 = vshll.u32 683565275, %v220
    %v224 = vshrl.u32 2475754826, %v221
    %v225 = vor.u32 %v223, %v224
    %v226 = vshll.u32 2475754826, %v220
    %v227 = vshrl.u32 2131351028, %v221
    %v228 = vor.u32 %v226, %v227
    %v229 = vshll.u32 2131351028, %v220
    %v230 = vshrl.u32 2102212464, %v221
    %v231 = vor.u32 %v229, %v230
    %v232 = vshll.u32 2102212464, %v220
    %v233 = vshrl.u32 920167782, %v221
    %v234 = vor.u32 %v232, %v233
    %v235 = vshll.u32 920167782, %v220
    %v236 = vshrl.u32 1326507024, %v221
    %v237 = vor.u32 %v235, %v236
    %vm238 = vcmp.lt.s32.totalorder %v219, 1
    %vm239 = vcmp.lt.s32.totalorder %v219, 2
    %vm240 = vcmp.lt.s32.totalorder %v219, 3
    %vm241 = vcmp.lt.s32.totalorder %v219, 4
    %v242 = vsel %vm238, %v222, %v225
    %v243 = vsel %vm241, %v231, 2102212464
    %v244 = vsel %vm240, %v228, %v243
    %v245 = vsel %vm239, %v242, %v244
    %v246 = vsel %vm238, %v225, %v228
    %v247 = vsel %vm241, %v234, 920167782
    %v248 = vsel %vm240, %v231, %v247
    %v249 = vsel %vm239, %v246, %v248
    %v250 = vsel %vm238, %v228, %v231
    %v251 = vsel %vm241, %v237, 1326507024
    %v252 = vsel %vm240, %v234, %v251
    %v253 = vsel %vm239, %v250, %v252
    %v254 = vshll.u32 %v214, 8
    %v255 = vand.u32 %v254, 65535
    %v256 = vshrl.u32 %v254, 16
    %v257 = vand.u32 %v253, 65535
    %v258 = vshrl.u32 %v253, 16
    %v259 = vmul.u32 %v255, %v257
    %v260 = vmul.u32 %v255, %v258
    %v261 = vmul.u32 %v256, %v257
    %v262 = vmul.u32 %v256, %v258
    %v263 = vshll.u32 %v260, 16
    %v264 = vshrl.u32 %v260, 16
    %v265 = vshll.u32 %v261, 16
    %v266 = vshrl.u32 %v261, 16
    %vm267 = vc.u32 %v259, %v263
    %v268 = vsel %vm267, 1, 0
    %v269 = vadd.s32 %v259, %v263
    %v270 = vadd.s32 %v262, %v268
    %vm271 = vc.u32 %v269, %v265
    %v272 = vsel %vm271, 1, 0
    %v273 = vadd.s32 %v269, %v265
    %v274 = vadd.s32 %v270, %v272
    %v275 = vadd.s32 %v274, %v264
    %v276 = vadd.s32 %v275, %v266
    %v277 = vand.u32 %v254, 65535
    %v278 = vshrl.u32 %v254, 16
    %v279 = vand.u32 %v249, 65535
    %v280 = vshrl.u32 %v249, 16
    %v281 = vmul.u32 %v277, %v279
    %v282 = vmul.u32 %v277, %v280
    %v283 = vmul.u32 %v278, %v279
    %v284 = vmul.u32 %v278, %v280
    %v285 = vshll.u32 %v282, 16
    %v286 = vshrl.u32 %v282, 16
    %v287 = vshll.u32 %v283, 16
    %v288 = vshrl.u32 %v283, 16
    %vm289 = vc.u32 %v281, %v285
    %v290 = vsel %vm289, 1, 0
    %v291 = vadd.s32 %v281, %v285
    %v292 = vadd.s32 %v284, %v290
    %vm293 = vc.u32 %v291, %v287
    %v294 = vsel %vm293, 1, 0
    %v295 = vadd.s32 %v291, %v287
    %v296 = vadd.s32 %v292, %v294
    %v297 = vadd.s32 %v296, %v286
    %v298 = vadd.s32 %v297, %v288
    %v299 = vmul.u32 %v254, %v245
    %v300 = vadd.s32 %v276, %v295
    %vm301 = vc.u32 %v276, %v295
    %v302 = vadd.s32 %v298, 1
    %v303 = vsel %vm301, %v302, %v298
    %v304 = vadd.s32 %v299, %v303
    %v305 = vadd.s32 %v304, 536870912
    %v306 = vshrl.u32 %v305, 30
    %v307 = vshll.u32 %v306, 30
    %v308 = vsub.s32 %v304, %v307
    %vm309 = vcmp.lt.s32.totalorder %v308, 0
    %v310 = vsub.s32 0, %v308
    %v311 = vsel %vm309, %v310, %v308
    %v312 = vclz %v311
    %v313 = vsub.s32 %v312, 2
    %vm314 = vcmp.gt.s32.totalorder 0, %v313
    %v315 = vsel %vm314, 0, %v313
    %v316 = vsub.s32 32, %v315
    %v317 = vshll.u32 %v308, %v315
    %v318 = vshrl.u32 %v300, %v316
    %v319 = vor.u32 %v317, %v318
    %v320 = vsub.s32 4294967266, %v315
    %v321 = vadd.s32 %v320, 127
    %v322 = vshll.u32 %v321, 23
    %v323 = vor.u32 4788187, %v322
    %v324 = vand.u32 2147483647, %v323
    %v326 = vcvt.s32.f32 %v319
    %v327 = vmul.f32 %v326, %v324
    %v328 = vxor.u32 %v327, 2147483648
    %v329 = vsel %vm208, %v328, %v327
    %v330 = vsub.s32 4, %v306
    %v331 = vsel %vm208, %v330, %v306
    %v332 = vsel %vm207, %v51, %v329
    %v333 = vsel %vm207, 0, %v331
    %v334 = vmul.f32 %v332, %v332
    %v335 = vmul.f32 %v334, -0.001358992
    %v336 = vadd.f32 %v335, 0.041655596
    %v337 = vmul.f32 %v334, %v336
    %v338 = vadd.f32 %v337, -0.4999988
    %v339 = vmul.f32 %v334, %v338
    %v340 = vadd.f32 1.0, %v339
    %v341 = vmul.f32 %v332, %v332
    %v342 = vmul.f32 %v341, -0.00019511016
    %v343 = vadd.f32 %v342, 0.008332121
    %v344 = vmul.f32 %v341, %v343
    %v345 = vadd.f32 %v344, -0.16666654
    %v346 = vmul.f32 %v341, %v345
    %v347 = vadd.f32 %v346, 1.0
    %v348 = vmul.f32 %v347, %v332
    %vm349 = vweird.f32 %v51
    %v350 = vadd.s32 %v333, 3
    %v351 = vand.u32 %v350, 3
    %vm352 = vcmp.lt.s32.totalorder %v351, 2
    %vm353 = vcmp.eq.s32.totalorder %v351, 0
    %v354 = vxor.u32 %v348, 2147483648
    %v355 = vsel %vm353, %v340, %v354
    %vm356 = vcmp.eq.s32.totalorder %v351, 2
    %v357 = vxor.u32 %v340, 2147483648
    %v358 = vsel %vm356, %v357, %v348
    %v359 = vsel %vm352, %v355, %v358
    %v360 = vsel %vm349, nan, %v359
    %s361 = sld [smem:[#allocation3]]
    %s362 = sld [smem:[#allocation3 + $0x1]]
    %s363 = sld [smem:[#allocation3 + $0x2]]
    %s364 = sld [smem:[#allocation3 + $0x3]]
    %s365 = sld [smem:[#allocation3 + $0x4]]
    %s366 = sld [smem:[#allocation3 + $0x5]]
    %s367 = sld [smem:[#allocation3 + $0x6]]
    %v368 = vstv %s361
    %v369 = vmul.f32 %v205, %v368
    %v370 = vstv %s362
    %v371 = vmul.f32 %v205, %v370
    %v372 = vstv %s365
    %v373 = vmul.f32 %v360, %v372
    %v374 = vsub.f32 %v371, %v373
    %v375 = vstv %s363
    %v376 = vmul.f32 %v205, %v375
    %v377 = vstv %s366
    %v378 = vmul.f32 %v360, %v377
    %v379 = vsub.f32 %v376, %v378
    %v380 = vstv %s364
    %v381 = vmul.f32 %v205, %v380
    %v382 = vstv %s367
    %v383 = vmul.f32 %v360, %v382
    %v384 = vsub.f32 %v381, %v383
    %v385 = vmul.f32 %v360, %v368
    %v386 = vmul.f32 %v360, %v370
    %v387 = vmul.f32 %v205, %v372
    %v388 = vadd.f32 %v386, %v387
    %v389 = vmul.f32 %v360, %v375
    %v390 = vmul.f32 %v205, %v377
    %v391 = vadd.f32 %v389, %v390
    %v392 = vmul.f32 %v360, %v380
    %v393 = vmul.f32 %v205, %v382
    %v394 = vadd.f32 %v392, %v393
    %s395 = sld [smem:[#allocation3 + $0x7]]
    %s396 = sld [smem:[#allocation3 + $0x8]]
    %s397 = sld [smem:[#allocation3 + $0x9]]
    %s398 = sld [smem:[#allocation3 + $0xa]]
    %399 = vst [vmem:[#allocation8] sm:$0xff] %v369
    %s400 = scalar_lea.vmem [#allocation8], 8
    %401 = vst [vmem:[%s400] sm:$0xff] %v374
    %s402 = scalar_lea.vmem [#allocation8], 16
    %403 = vst [vmem:[%s402] sm:$0xff] %v379
    %s404 = scalar_lea.vmem [#allocation8], 24
    %405 = vst [vmem:[%s404] sm:$0xff] %v384
    %s406 = scalar_lea.vmem [#allocation8], 32
    %407 = vst [vmem:[%s406] sm:$0xff] %v385
    %s408 = scalar_lea.vmem [#allocation8], 40
    %409 = vst [vmem:[%s408] sm:$0xff] %v388
    %s410 = scalar_lea.vmem [#allocation8], 48
    %411 = vst [vmem:[%s410] sm:$0xff] %v391
    %s412 = scalar_lea.vmem [#allocation8], 56
    %413 = vst [vmem:[%s412] sm:$0xff] %v394
    %v414 = vstv %s395
    %s415 = scalar_lea.vmem [#allocation8], 64
    %416 = vst [vmem:[%s415] sm:$0xff] %v414
    %v417 = vstv %s396
    %s418 = scalar_lea.vmem [#allocation8], 72
    %419 = vst [vmem:[%s418] sm:$0xff] %v417
    %v420 = vstv %s397
    %s421 = scalar_lea.vmem [#allocation8], 80
    %422 = vst [vmem:[%s421] sm:$0xff] %v420
    %v423 = vstv %s398
    %s424 = scalar_lea.vmem [#allocation8], 88
    %425 = vst [vmem:[%s424] sm:$0xff] %v423
    %s426 = scalar_lea.vmem [#allocation7], 8
    %v427 = vld [vmem:[%s426] sm:$0xff]
    %v428 = vmul.f32 %v427, %v47
    %s429 = scalar_lea.vmem [#allocation7], 40
    %v430 = vld [vmem:[%s429] sm:$0xff]
    %v431 = vadd.f32 %v428, %v430
    %v432 = vand.u32 2147483647, %v431
    %vm433 = vcmp.le.f32.partialorder %v432, 0.7853982
    %vm434 = vcmp.lt.s32.totalorder %v431, 0
    %v435 = vand.u32 %v431, 2139095040
    %v436 = vshrl.u32 %v435, 23
    %v437 = vsub.s32 %v436, 127
    %v438 = vand.u32 2147483647, %v431
    %v439 = vand.u32 %v438, 8388607
    %v440 = vor.u32 %v439, 8388608
    %v441 = vsub.s32 0, %v440
    %v442 = vadd.s32 %v437, 1
    %vm443 = vcmp.gt.s32.totalorder %v442, 0
    %v444 = vsel %vm443, %v442, 0
    %v445 = vshrl.u32 %v444, 5
    %v446 = vand.u32 %v444, 31
    %v447 = vsub.s32 32, %v446
    %v448 = vshrl.u32 683565275, %v447
    %v449 = vshll.u32 683565275, %v446
    %v450 = vshrl.u32 2475754826, %v447
    %v451 = vor.u32 %v449, %v450
    %v452 = vshll.u32 2475754826, %v446
    %v453 = vshrl.u32 2131351028, %v447
    %v454 = vor.u32 %v452, %v453
    %v455 = vshll.u32 2131351028, %v446
    %v456 = vshrl.u32 2102212464, %v447
    %v457 = vor.u32 %v455, %v456
    %v458 = vshll.u32 2102212464, %v446
    %v459 = vshrl.u32 920167782, %v447
    %v460 = vor.u32 %v458, %v459
    %v461 = vshll.u32 920167782, %v446
    %v462 = vshrl.u32 1326507024, %v447
    %v463 = vor.u32 %v461, %v462
    %vm464 = vcmp.lt.s32.totalorder %v445, 1
    %vm465 = vcmp.lt.s32.totalorder %v445, 2
    %vm466 = vcmp.lt.s32.totalorder %v445, 3
    %vm467 = vcmp.lt.s32.totalorder %v445, 4
    %v468 = vsel %vm464, %v448, %v451
    %v469 = vsel %vm467, %v457, 2102212464
    %v470 = vsel %vm466, %v454, %v469
    %v471 = vsel %vm465, %v468, %v470
    %v472 = vsel %vm464, %v451, %v454
    %v473 = vsel %vm467, %v460, 920167782
    %v474 = vsel %vm466, %v457, %v473
    %v475 = vsel %vm465, %v472, %v474
    %v476 = vsel %vm464, %v454, %v457
    %v477 = vsel %vm467, %v463, 1326507024
    %v478 = vsel %vm466, %v460, %v477
    %v479 = vsel %vm465, %v476, %v478
    %v480 = vshll.u32 %v440, 8
    %v481 = vand.u32 %v480, 65535
    %v482 = vshrl.u32 %v480, 16
    %v483 = vand.u32 %v479, 65535
    %v484 = vshrl.u32 %v479, 16
    %v485 = vmul.u32 %v481, %v483
    %v486 = vmul.u32 %v481, %v484
    %v487 = vmul.u32 %v482, %v483
    %v488 = vmul.u32 %v482, %v484
    %v489 = vshll.u32 %v486, 16
    %v490 = vshrl.u32 %v486, 16
    %v491 = vshll.u32 %v487, 16
    %v492 = vshrl.u32 %v487, 16
    %vm493 = vc.u32 %v485, %v489
    %v494 = vsel %vm493, 1, 0
    %v495 = vadd.s32 %v485, %v489
    %v496 = vadd.s32 %v488, %v494
    %vm497 = vc.u32 %v495, %v491
    %v498 = vsel %vm497, 1, 0
    %v499 = vadd.s32 %v495, %v491
    %v500 = vadd.s32 %v496, %v498
    %v501 = vadd.s32 %v500, %v490
    %v502 = vadd.s32 %v501, %v492
    %v503 = vand.u32 %v480, 65535
    %v504 = vshrl.u32 %v480, 16
    %v505 = vand.u32 %v475, 65535
    %v506 = vshrl.u32 %v475, 16
    %v507 = vmul.u32 %v503, %v505
    %v508 = vmul.u32 %v503, %v506
    %v509 = vmul.u32 %v504, %v505
    %v510 = vmul.u32 %v504, %v506
    %v511 = vshll.u32 %v508, 16
    %v512 = vshrl.u32 %v508, 16
    %v513 = vshll.u32 %v509, 16
    %v514 = vshrl.u32 %v509, 16
    %vm515 = vc.u32 %v507, %v511
    %v516 = vsel %vm515, 1, 0
    %v517 = vadd.s32 %v507, %v511
    %v518 = vadd.s32 %v510, %v516
    %vm519 = vc.u32 %v517, %v513
    %v520 = vsel %vm519, 1, 0
    %v521 = vadd.s32 %v517, %v513
    %v522 = vadd.s32 %v518, %v520
    %v523 = vadd.s32 %v522, %v512
    %v524 = vadd.s32 %v523, %v514
    %v525 = vmul.u32 %v480, %v471
    %v526 = vadd.s32 %v502, %v521
    %vm527 = vc.u32 %v502, %v521
    %v528 = vadd.s32 %v524, 1
    %v529 = vsel %vm527, %v528, %v524
    %v530 = vadd.s32 %v525, %v529
    %v531 = vadd.s32 %v530, 536870912
    %v532 = vshrl.u32 %v531, 30
    %v533 = vshll.u32 %v532, 30
    %v534 = vsub.s32 %v530, %v533
    %vm535 = vcmp.lt.s32.totalorder %v534, 0
    %v536 = vsub.s32 0, %v534
    %v537 = vsel %vm535, %v536, %v534
    %v538 = vclz %v537
    %v539 = vsub.s32 %v538, 2
    %vm540 = vcmp.gt.s32.totalorder 0, %v539
    %v541 = vsel %vm540, 0, %v539
    %v542 = vsub.s32 32, %v541
    %v543 = vshll.u32 %v534, %v541
    %v544 = vshrl.u32 %v526, %v542
    %v545 = vor.u32 %v543, %v544
    %v546 = vsub.s32 4294967266, %v541
    %v547 = vadd.s32 %v546, 127
    %v548 = vshll.u32 %v547, 23
    %v549 = vor.u32 4788187, %v548
    %v550 = vand.u32 2147483647, %v549
    %v552 = vcvt.s32.f32 %v545
    %v553 = vmul.f32 %v552, %v550
    %v554 = vxor.u32 %v553, 2147483648
    %v555 = vsel %vm434, %v554, %v553
    %v556 = vsub.s32 4, %v532
    %v557 = vsel %vm434, %v556, %v532
    %v558 = vsel %vm433, %v431, %v555
    %v559 = vsel %vm433, 0, %v557
    %v560 = vmul.f32 %v558, %v558
    %v561 = vmul.f32 %v560, -0.001358992
    %v562 = vadd.f32 %v561, 0.041655596
    %v563 = vmul.f32 %v560, %v562
    %v564 = vadd.f32 %v563, -0.4999988
    %v565 = vmul.f32 %v560, %v564
    %v566 = vadd.f32 1.0, %v565
    %v567 = vmul.f32 %v558, %v558
    %v568 = vmul.f32 %v567, -0.00019511016
    %v569 = vadd.f32 %v568, 0.008332121
    %v570 = vmul.f32 %v567, %v569
    %v571 = vadd.f32 %v570, -0.16666654
    %v572 = vmul.f32 %v567, %v571
    %v573 = vadd.f32 %v572, 1.0
    %v574 = vmul.f32 %v573, %v558
    %vm575 = vweird.f32 %v431
    %v576 = vand.u32 %v559, 3
    %vm577 = vcmp.lt.s32.totalorder %v576, 2
    %vm578 = vcmp.eq.s32.totalorder %v576, 0
    %v579 = vxor.u32 %v574, 2147483648
    %v580 = vsel %vm578, %v566, %v579
    %vm581 = vcmp.eq.s32.totalorder %v576, 2
    %v582 = vxor.u32 %v566, 2147483648
    %v583 = vsel %vm581, %v582, %v574
    %v584 = vsel %vm577, %v580, %v583
    %v585 = vsel %vm575, nan, %v584
    %v586 = vand.u32 2147483647, %v431
    %vm587 = vcmp.le.f32.partialorder %v586, 0.7853982
    %vm588 = vcmp.lt.s32.totalorder %v431, 0
    %v589 = vand.u32 %v431, 2139095040
    %v590 = vshrl.u32 %v589, 23
    %v591 = vsub.s32 %v590, 127
    %v592 = vand.u32 2147483647, %v431
    %v593 = vand.u32 %v592, 8388607
    %v594 = vor.u32 %v593, 8388608
    %v595 = vsub.s32 0, %v594
    %v596 = vadd.s32 %v591, 1
    %vm597 = vcmp.gt.s32.totalorder %v596, 0
    %v598 = vsel %vm597, %v596, 0
    %v599 = vshrl.u32 %v598, 5
    %v600 = vand.u32 %v598, 31
    %v601 = vsub.s32 32, %v600
    %v602 = vshrl.u32 683565275, %v601
    %v603 = vshll.u32 683565275, %v600
    %v604 = vshrl.u32 2475754826, %v601
    %v605 = vor.u32 %v603, %v604
    %v606 = vshll.u32 2475754826, %v600
    %v607 = vshrl.u32 2131351028, %v601
    %v608 = vor.u32 %v606, %v607
    %v609 = vshll.u32 2131351028, %v600
    %v610 = vshrl.u32 2102212464, %v601
    %v611 = vor.u32 %v609, %v610
    %v612 = vshll.u32 2102212464, %v600
    %v613 = vshrl.u32 920167782, %v601
    %v614 = vor.u32 %v612, %v613
    %v615 = vshll.u32 920167782, %v600
    %v616 = vshrl.u32 1326507024, %v601
    %v617 = vor.u32 %v615, %v616
    %vm618 = vcmp.lt.s32.totalorder %v599, 1
    %vm619 = vcmp.lt.s32.totalorder %v599, 2
    %vm620 = vcmp.lt.s32.totalorder %v599, 3
    %vm621 = vcmp.lt.s32.totalorder %v599, 4
    %v622 = vsel %vm618, %v602, %v605
    %v623 = vsel %vm621, %v611, 2102212464
    %v624 = vsel %vm620, %v608, %v623
    %v625 = vsel %vm619, %v622, %v624
    %v626 = vsel %vm618, %v605, %v608
    %v627 = vsel %vm621, %v614, 920167782
    %v628 = vsel %vm620, %v611, %v627
    %v629 = vsel %vm619, %v626, %v628
    %v630 = vsel %vm618, %v608, %v611
    %v631 = vsel %vm621, %v617, 1326507024
    %v632 = vsel %vm620, %v614, %v631
    %v633 = vsel %vm619, %v630, %v632
    %v634 = vshll.u32 %v594, 8
    %v635 = vand.u32 %v634, 65535
    %v636 = vshrl.u32 %v634, 16
    %v637 = vand.u32 %v633, 65535
    %v638 = vshrl.u32 %v633, 16
    %v639 = vmul.u32 %v635, %v637
    %v640 = vmul.u32 %v635, %v638
    %v641 = vmul.u32 %v636, %v637
    %v642 = vmul.u32 %v636, %v638
    %v643 = vshll.u32 %v640, 16
    %v644 = vshrl.u32 %v640, 16
    %v645 = vshll.u32 %v641, 16
    %v646 = vshrl.u32 %v641, 16
    %vm647 = vc.u32 %v639, %v643
    %v648 = vsel %vm647, 1, 0
    %v649 = vadd.s32 %v639, %v643
    %v650 = vadd.s32 %v642, %v648
    %vm651 = vc.u32 %v649, %v645
    %v652 = vsel %vm651, 1, 0
    %v653 = vadd.s32 %v649, %v645
    %v654 = vadd.s32 %v650, %v652
    %v655 = vadd.s32 %v654, %v644
    %v656 = vadd.s32 %v655, %v646
    %v657 = vand.u32 %v634, 65535
    %v658 = vshrl.u32 %v634, 16
    %v659 = vand.u32 %v629, 65535
    %v660 = vshrl.u32 %v629, 16
    %v661 = vmul.u32 %v657, %v659
    %v662 = vmul.u32 %v657, %v660
    %v663 = vmul.u32 %v658, %v659
    %v664 = vmul.u32 %v658, %v660
    %v665 = vshll.u32 %v662, 16
    %v666 = vshrl.u32 %v662, 16
    %v667 = vshll.u32 %v663, 16
    %v668 = vshrl.u32 %v663, 16
    %vm669 = vc.u32 %v661, %v665
    %v670 = vsel %vm669, 1, 0
    %v671 = vadd.s32 %v661, %v665
    %v672 = vadd.s32 %v664, %v670
    %vm673 = vc.u32 %v671, %v667
    %v674 = vsel %vm673, 1, 0
    %v675 = vadd.s32 %v671, %v667
    %v676 = vadd.s32 %v672, %v674
    %v677 = vadd.s32 %v676, %v666
    %v678 = vadd.s32 %v677, %v668
    %v679 = vmul.u32 %v634, %v625
    %v680 = vadd.s32 %v656, %v675
    %vm681 = vc.u32 %v656, %v675
    %v682 = vadd.s32 %v678, 1
    %v683 = vsel %vm681, %v682, %v678
    %v684 = vadd.s32 %v679, %v683
    %v685 = vadd.s32 %v684, 536870912
    %v686 = vshrl.u32 %v685, 30
    %v687 = vshll.u32 %v686, 30
    %v688 = vsub.s32 %v684, %v687
    %vm689 = vcmp.lt.s32.totalorder %v688, 0
    %v690 = vsub.s32 0, %v688
    %v691 = vsel %vm689, %v690, %v688
    %v692 = vclz %v691
    %v693 = vsub.s32 %v692, 2
    %vm694 = vcmp.gt.s32.totalorder 0, %v693
    %v695 = vsel %vm694, 0, %v693
    %v696 = vsub.s32 32, %v695
    %v697 = vshll.u32 %v688, %v695
    %v698 = vshrl.u32 %v680, %v696
    %v699 = vor.u32 %v697, %v698
    %v700 = vsub.s32 4294967266, %v695
    %v701 = vadd.s32 %v700, 127
    %v702 = vshll.u32 %v701, 23
    %v703 = vor.u32 4788187, %v702
    %v704 = vand.u32 2147483647, %v703
    %v706 = vcvt.s32.f32 %v699
    %v707 = vmul.f32 %v706, %v704
    %v708 = vxor.u32 %v707, 2147483648
    %v709 = vsel %vm588, %v708, %v707
    %v710 = vsub.s32 4, %v686
    %v711 = vsel %vm588, %v710, %v686
    %v712 = vsel %vm587, %v431, %v709
    %v713 = vsel %vm587, 0, %v711
    %v714 = vmul.f32 %v712, %v712
    %v715 = vmul.f32 %v714, -0.001358992
    %v716 = vadd.f32 %v715, 0.041655596
    %v717 = vmul.f32 %v714, %v716
    %v718 = vadd.f32 %v717, -0.4999988
    %v719 = vmul.f32 %v714, %v718
    %v720 = vadd.f32 1.0, %v719
    %v721 = vmul.f32 %v712, %v712
    %v722 = vmul.f32 %v721, -0.00019511016
    %v723 = vadd.f32 %v722, 0.008332121
    %v724 = vmul.f32 %v721, %v723
    %v725 = vadd.f32 %v724, -0.16666654
    %v726 = vmul.f32 %v721, %v725
    %v727 = vadd.f32 %v726, 1.0
    %v728 = vmul.f32 %v727, %v712
    %vm729 = vweird.f32 %v431
    %v730 = vadd.s32 %v713, 3
    %v731 = vand.u32 %v730, 3
    %vm732 = vcmp.lt.s32.totalorder %v731, 2
    %vm733 = vcmp.eq.s32.totalorder %v731, 0
    %v734 = vxor.u32 %v728, 2147483648
    %v735 = vsel %vm733, %v720, %v734
    %vm736 = vcmp.eq.s32.totalorder %v731, 2
    %v737 = vxor.u32 %v720, 2147483648
    %v738 = vsel %vm736, %v737, %v728
    %v739 = vsel %vm732, %v735, %v738
    %v740 = vsel %vm729, nan, %v739
    %s741 = sld [smem:[#allocation3 + $0x80]]
    %s742 = sld [smem:[#allocation3 + $0x81]]
    %s743 = sld [smem:[#allocation3 + $0x82]]
    %s744 = sld [smem:[#allocation3 + $0x83]]
    %s745 = sld [smem:[#allocation3 + $0x84]]
    %s746 = sld [smem:[#allocation3 + $0x85]]
    %s747 = sld [smem:[#allocation3 + $0x86]]
    %v748 = vstv %s741
    %v749 = vmul.f32 %v585, %v748
    %v750 = vstv %s742
    %v751 = vmul.f32 %v585, %v750
    %v752 = vstv %s745
    %v753 = vmul.f32 %v740, %v752
    %v754 = vsub.f32 %v751, %v753
    %v755 = vstv %s743
    %v756 = vmul.f32 %v585, %v755
    %v757 = vstv %s746
    %v758 = vmul.f32 %v740, %v757
    %v759 = vsub.f32 %v756, %v758
    %v760 = vstv %s744
    %v761 = vmul.f32 %v585, %v760
    %v762 = vstv %s747
    %v763 = vmul.f32 %v740, %v762
    %v764 = vsub.f32 %v761, %v763
    %v765 = vmul.f32 %v740, %v748
    %v766 = vmul.f32 %v740, %v750
    %v767 = vmul.f32 %v585, %v752
    %v768 = vadd.f32 %v766, %v767
    %v769 = vmul.f32 %v740, %v755
    %v770 = vmul.f32 %v585, %v757
    %v771 = vadd.f32 %v769, %v770
    %v772 = vmul.f32 %v740, %v760
    %v773 = vmul.f32 %v585, %v762
    %v774 = vadd.f32 %v772, %v773
    %s775 = sld [smem:[#allocation3 + $0x87]]
    %s776 = sld [smem:[#allocation3 + $0x88]]
    %s777 = sld [smem:[#allocation3 + $0x89]]
    %s778 = sld [smem:[#allocation3 + $0x8a]]
    %v779 = vmul.f32 %v369, %v749
    %v780 = vmul.f32 %v374, %v765
    %v781 = vadd.f32 %v779, %v780
    %v782 = vstv %s775
    %v783 = vmul.f32 %v379, %v782
    %v784 = vadd.f32 %v781, %v783
    %v785 = vmul.f32 %v369, %v754
    %v786 = vmul.f32 %v374, %v768
    %v787 = vadd.f32 %v785, %v786
    %v788 = vstv %s776
    %v789 = vmul.f32 %v379, %v788
    %v790 = vadd.f32 %v787, %v789
    %v791 = vmul.f32 %v369, %v759
    %v792 = vmul.f32 %v374, %v771
    %v793 = vadd.f32 %v791, %v792
    %v794 = vstv %s777
    %v795 = vmul.f32 %v379, %v794
    %v796 = vadd.f32 %v793, %v795
    %v797 = vmul.f32 %v369, %v764
    %v798 = vmul.f32 %v374, %v774
    %v799 = vadd.f32 %v797, %v798
    %v800 = vstv %s778
    %v801 = vmul.f32 %v379, %v800
    %v802 = vadd.f32 %v799, %v801
    %v803 = vadd.f32 %v802, %v384
    %v804 = vmul.f32 %v385, %v749
    %v805 = vmul.f32 %v388, %v765
    %v806 = vadd.f32 %v804, %v805
    %v807 = vmul.f32 %v391, %v782
    %v808 = vadd.f32 %v806, %v807
    %v809 = vmul.f32 %v385, %v754
    %v810 = vmul.f32 %v388, %v768
    %v811 = vadd.f32 %v809, %v810
    %v812 = vmul.f32 %v391, %v788
    %v813 = vadd.f32 %v811, %v812
    %v814 = vmul.f32 %v385, %v759
    %v815 = vmul.f32 %v388, %v771
    %v816 = vadd.f32 %v814, %v815
    %v817 = vmul.f32 %v391, %v794
    %v818 = vadd.f32 %v816, %v817
    %v819 = vmul.f32 %v385, %v764
    %v820 = vmul.f32 %v388, %v774
    %v821 = vadd.f32 %v819, %v820
    %v822 = vmul.f32 %v391, %v800
    %v823 = vadd.f32 %v821, %v822
    %v824 = vadd.f32 %v823, %v394
    %v825 = vmul.f32 %v414, %v749
    %v826 = vmul.f32 %v417, %v765
    %v827 = vadd.f32 %v825, %v826
    %s828 = smul.f32 %s397, %s775
    %v829 = vstv %s828
    %v830 = vadd.f32 %v827, %v829
    %v831 = vmul.f32 %v414, %v754
    %v832 = vmul.f32 %v417, %v768
    %v833 = vadd.f32 %v831, %v832
    %s834 = smul.f32 %s397, %s776
    %v835 = vstv %s834
    %v836 = vadd.f32 %v833, %v835
    %v837 = vmul.f32 %v414, %v759
    %v838 = vmul.f32 %v417, %v771
    %v839 = vadd.f32 %v837, %v838
    %s840 = smul.f32 %s397, %s777
    %v841 = vstv %s840
    %v842 = vadd.f32 %v839, %v841
    %v843 = vmul.f32 %v414, %v764
    %v844 = vmul.f32 %v417, %v774
    %v845 = vadd.f32 %v843, %v844
    %s846 = smul.f32 %s397, %s778
    %v847 = vstv %s846
    %v848 = vadd.f32 %v845, %v847
    %v849 = vadd.f32 %v848, %v423
    %s850 = scalar_lea.vmem [#allocation8], 96
    %851 = vst [vmem:[%s850] sm:$0xff] %v784
    %s852 = scalar_lea.vmem [#allocation8], 104
    %853 = vst [vmem:[%s852] sm:$0xff] %v790
    %s854 = scalar_lea.vmem [#allocation8], 112
    %855 = vst [vmem:[%s854] sm:$0xff] %v796
    %s856 = scalar_lea.vmem [#allocation8], 120
    %857 = vst [vmem:[%s856] sm:$0xff] %v803
    %s858 = scalar_lea.vmem [#allocation8], 128
    %859 = vst [vmem:[%s858] sm:$0xff] %v808
    %s860 = scalar_lea.vmem [#allocation8], 136
    %861 = vst [vmem:[%s860] sm:$0xff] %v813
    %s862 = scalar_lea.vmem [#allocation8], 144
    %863 = vst [vmem:[%s862] sm:$0xff] %v818
    %s864 = scalar_lea.vmem [#allocation8], 152
    %865 = vst [vmem:[%s864] sm:$0xff] %v824
    %s866 = scalar_lea.vmem [#allocation8], 160
    %867 = vst [vmem:[%s866] sm:$0xff] %v830
    %s868 = scalar_lea.vmem [#allocation8], 168
    %869 = vst [vmem:[%s868] sm:$0xff] %v836
    %s870 = scalar_lea.vmem [#allocation8], 176
    %871 = vst [vmem:[%s870] sm:$0xff] %v842
    %s872 = scalar_lea.vmem [#allocation8], 184
    %873 = vst [vmem:[%s872] sm:$0xff] %v849
    %s874 = scalar_lea.vmem [#allocation7], 16
    %v875 = vld [vmem:[%s874] sm:$0xff]
    %v876 = vmul.f32 %v875, %v47
    %s877 = scalar_lea.vmem [#allocation7], 48
    %v878 = vld [vmem:[%s877] sm:$0xff]
    %v879 = vadd.f32 %v876, %v878
    %v880 = vand.u32 2147483647, %v879
    %vm881 = vcmp.le.f32.partialorder %v880, 0.7853982
    %vm882 = vcmp.lt.s32.totalorder %v879, 0
    %v883 = vand.u32 %v879, 2139095040
    %v884 = vshrl.u32 %v883, 23
    %v885 = vsub.s32 %v884, 127
    %v886 = vand.u32 2147483647, %v879
    %v887 = vand.u32 %v886, 8388607
    %v888 = vor.u32 %v887, 8388608
    %v889 = vsub.s32 0, %v888
    %v890 = vadd.s32 %v885, 1
    %vm891 = vcmp.gt.s32.totalorder %v890, 0
    %v892 = vsel %vm891, %v890, 0
    %v893 = vshrl.u32 %v892, 5
    %v894 = vand.u32 %v892, 31
    %v895 = vsub.s32 32, %v894
    %v896 = vshrl.u32 683565275, %v895
    %v897 = vshll.u32 683565275, %v894
    %v898 = vshrl.u32 2475754826, %v895
    %v899 = vor.u32 %v897, %v898
    %v900 = vshll.u32 2475754826, %v894
    %v901 = vshrl.u32 2131351028, %v895
    %v902 = vor.u32 %v900, %v901
    %v903 = vshll.u32 2131351028, %v894
    %v904 = vshrl.u32 2102212464, %v895
    %v905 = vor.u32 %v903, %v904
    %v906 = vshll.u32 2102212464, %v894
    %v907 = vshrl.u32 920167782, %v895
    %v908 = vor.u32 %v906, %v907
    %v909 = vshll.u32 920167782, %v894
    %v910 = vshrl.u32 1326507024, %v895
    %v911 = vor.u32 %v909, %v910
    %vm912 = vcmp.lt.s32.totalorder %v893, 1
    %vm913 = vcmp.lt.s32.totalorder %v893, 2
    %vm914 = vcmp.lt.s32.totalorder %v893, 3
    %vm915 = vcmp.lt.s32.totalorder %v893, 4
    %v916 = vsel %vm912, %v896, %v899
    %v917 = vsel %vm915, %v905, 2102212464
    %v918 = vsel %vm914, %v902, %v917
    %v919 = vsel %vm913, %v916, %v918
    %v920 = vsel %vm912, %v899, %v902
    %v921 = vsel %vm915, %v908, 920167782
    %v922 = vsel %vm914, %v905, %v921
    %v923 = vsel %vm913, %v920, %v922
    %v924 = vsel %vm912, %v902, %v905
    %v925 = vsel %vm915, %v911, 1326507024
    %v926 = vsel %vm914, %v908, %v925
    %v927 = vsel %vm913, %v924, %v926
    %v928 = vshll.u32 %v888, 8
    %v929 = vand.u32 %v928, 65535
    %v930 = vshrl.u32 %v928, 16
    %v931 = vand.u32 %v927, 65535
    %v932 = vshrl.u32 %v927, 16
    %v933 = vmul.u32 %v929, %v931
    %v934 = vmul.u32 %v929, %v932
    %v935 = vmul.u32 %v930, %v931
    %v936 = vmul.u32 %v930, %v932
    %v937 = vshll.u32 %v934, 16
    %v938 = vshrl.u32 %v934, 16
    %v939 = vshll.u32 %v935, 16
    %v940 = vshrl.u32 %v935, 16
    %vm941 = vc.u32 %v933, %v937
    %v942 = vsel %vm941, 1, 0
    %v943 = vadd.s32 %v933, %v937
    %v944 = vadd.s32 %v936, %v942
    %vm945 = vc.u32 %v943, %v939
    %v946 = vsel %vm945, 1, 0
    %v947 = vadd.s32 %v943, %v939
    %v948 = vadd.s32 %v944, %v946
    %v949 = vadd.s32 %v948, %v938
    %v950 = vadd.s32 %v949, %v940
    %v951 = vand.u32 %v928, 65535
    %v952 = vshrl.u32 %v928, 16
    %v953 = vand.u32 %v923, 65535
    %v954 = vshrl.u32 %v923, 16
    %v955 = vmul.u32 %v951, %v953
    %v956 = vmul.u32 %v951, %v954
    %v957 = vmul.u32 %v952, %v953
    %v958 = vmul.u32 %v952, %v954
    %v959 = vshll.u32 %v956, 16
    %v960 = vshrl.u32 %v956, 16
    %v961 = vshll.u32 %v957, 16
    %v962 = vshrl.u32 %v957, 16
    %vm963 = vc.u32 %v955, %v959
    %v964 = vsel %vm963, 1, 0
    %v965 = vadd.s32 %v955, %v959
    %v966 = vadd.s32 %v958, %v964
    %vm967 = vc.u32 %v965, %v961
    %v968 = vsel %vm967, 1, 0
    %v969 = vadd.s32 %v965, %v961
    %v970 = vadd.s32 %v966, %v968
    %v971 = vadd.s32 %v970, %v960
    %v972 = vadd.s32 %v971, %v962
    %v973 = vmul.u32 %v928, %v919
    %v974 = vadd.s32 %v950, %v969
    %vm975 = vc.u32 %v950, %v969
    %v976 = vadd.s32 %v972, 1
    %v977 = vsel %vm975, %v976, %v972
    %v978 = vadd.s32 %v973, %v977
    %v979 = vadd.s32 %v978, 536870912
    %v980 = vshrl.u32 %v979, 30
    %v981 = vshll.u32 %v980, 30
    %v982 = vsub.s32 %v978, %v981
    %vm983 = vcmp.lt.s32.totalorder %v982, 0
    %v984 = vsub.s32 0, %v982
    %v985 = vsel %vm983, %v984, %v982
    %v986 = vclz %v985
    %v987 = vsub.s32 %v986, 2
    %vm988 = vcmp.gt.s32.totalorder 0, %v987
    %v989 = vsel %vm988, 0, %v987
    %v990 = vsub.s32 32, %v989
    %v991 = vshll.u32 %v982, %v989
    %v992 = vshrl.u32 %v974, %v990
    %v993 = vor.u32 %v991, %v992
    %v994 = vsub.s32 4294967266, %v989
    %v995 = vadd.s32 %v994, 127
    %v996 = vshll.u32 %v995, 23
    %v997 = vor.u32 4788187, %v996
    %v998 = vand.u32 2147483647, %v997
    %v1000 = vcvt.s32.f32 %v993
    %v1001 = vmul.f32 %v1000, %v998
    %v1002 = vxor.u32 %v1001, 2147483648
    %v1003 = vsel %vm882, %v1002, %v1001
    %v1004 = vsub.s32 4, %v980
    %v1005 = vsel %vm882, %v1004, %v980
    %v1006 = vsel %vm881, %v879, %v1003
    %v1007 = vsel %vm881, 0, %v1005
    %v1008 = vmul.f32 %v1006, %v1006
    %v1009 = vmul.f32 %v1008, -0.001358992
    %v1010 = vadd.f32 %v1009, 0.041655596
    %v1011 = vmul.f32 %v1008, %v1010
    %v1012 = vadd.f32 %v1011, -0.4999988
    %v1013 = vmul.f32 %v1008, %v1012
    %v1014 = vadd.f32 1.0, %v1013
    %v1015 = vmul.f32 %v1006, %v1006
    %v1016 = vmul.f32 %v1015, -0.00019511016
    %v1017 = vadd.f32 %v1016, 0.008332121
    %v1018 = vmul.f32 %v1015, %v1017
    %v1019 = vadd.f32 %v1018, -0.16666654
    %v1020 = vmul.f32 %v1015, %v1019
    %v1021 = vadd.f32 %v1020, 1.0
    %v1022 = vmul.f32 %v1021, %v1006
    %vm1023 = vweird.f32 %v879
    %v1024 = vand.u32 %v1007, 3
    %vm1025 = vcmp.lt.s32.totalorder %v1024, 2
    %vm1026 = vcmp.eq.s32.totalorder %v1024, 0
    %v1027 = vxor.u32 %v1022, 2147483648
    %v1028 = vsel %vm1026, %v1014, %v1027
    %vm1029 = vcmp.eq.s32.totalorder %v1024, 2
    %v1030 = vxor.u32 %v1014, 2147483648
    %v1031 = vsel %vm1029, %v1030, %v1022
    %v1032 = vsel %vm1025, %v1028, %v1031
    %v1033 = vsel %vm1023, nan, %v1032
    %v1034 = vand.u32 2147483647, %v879
    %vm1035 = vcmp.le.f32.partialorder %v1034, 0.7853982
    %vm1036 = vcmp.lt.s32.totalorder %v879, 0
    %v1037 = vand.u32 %v879, 2139095040
    %v1038 = vshrl.u32 %v1037, 23
    %v1039 = vsub.s32 %v1038, 127
    %v1040 = vand.u32 2147483647, %v879
    %v1041 = vand.u32 %v1040, 8388607
    %v1042 = vor.u32 %v1041, 8388608
    %v1043 = vsub.s32 0, %v1042
    %v1044 = vadd.s32 %v1039, 1
    %vm1045 = vcmp.gt.s32.totalorder %v1044, 0
    %v1046 = vsel %vm1045, %v1044, 0
    %v1047 = vshrl.u32 %v1046, 5
    %v1048 = vand.u32 %v1046, 31
    %v1049 = vsub.s32 32, %v1048
    %v1050 = vshrl.u32 683565275, %v1049
    %v1051 = vshll.u32 683565275, %v1048
    %v1052 = vshrl.u32 2475754826, %v1049
    %v1053 = vor.u32 %v1051, %v1052
    %v1054 = vshll.u32 2475754826, %v1048
    %v1055 = vshrl.u32 2131351028, %v1049
    %v1056 = vor.u32 %v1054, %v1055
    %v1057 = vshll.u32 2131351028, %v1048
    %v1058 = vshrl.u32 2102212464, %v1049
    %v1059 = vor.u32 %v1057, %v1058
    %v1060 = vshll.u32 2102212464, %v1048
    %v1061 = vshrl.u32 920167782, %v1049
    %v1062 = vor.u32 %v1060, %v1061
    %v1063 = vshll.u32 920167782, %v1048
    %v1064 = vshrl.u32 1326507024, %v1049
    %v1065 = vor.u32 %v1063, %v1064
    %vm1066 = vcmp.lt.s32.totalorder %v1047, 1
    %vm1067 = vcmp.lt.s32.totalorder %v1047, 2
    %vm1068 = vcmp.lt.s32.totalorder %v1047, 3
    %vm1069 = vcmp.lt.s32.totalorder %v1047, 4
    %v1070 = vsel %vm1066, %v1050, %v1053
    %v1071 = vsel %vm1069, %v1059, 2102212464
    %v1072 = vsel %vm1068, %v1056, %v1071
    %v1073 = vsel %vm1067, %v1070, %v1072
    %v1074 = vsel %vm1066, %v1053, %v1056
    %v1075 = vsel %vm1069, %v1062, 920167782
    %v1076 = vsel %vm1068, %v1059, %v1075
    %v1077 = vsel %vm1067, %v1074, %v1076
    %v1078 = vsel %vm1066, %v1056, %v1059
    %v1079 = vsel %vm1069, %v1065, 1326507024
    %v1080 = vsel %vm1068, %v1062, %v1079
    %v1081 = vsel %vm1067, %v1078, %v1080
    %v1082 = vshll.u32 %v1042, 8
    %v1083 = vand.u32 %v1082, 65535
    %v1084 = vshrl.u32 %v1082, 16
    %v1085 = vand.u32 %v1081, 65535
    %v1086 = vshrl.u32 %v1081, 16
    %v1087 = vmul.u32 %v1083, %v1085
    %v1088 = vmul.u32 %v1083, %v1086
    %v1089 = vmul.u32 %v1084, %v1085
    %v1090 = vmul.u32 %v1084, %v1086
    %v1091 = vshll.u32 %v1088, 16
    %v1092 = vshrl.u32 %v1088, 16
    %v1093 = vshll.u32 %v1089, 16
    %v1094 = vshrl.u32 %v1089, 16
    %vm1095 = vc.u32 %v1087, %v1091
    %v1096 = vsel %vm1095, 1, 0
    %v1097 = vadd.s32 %v1087, %v1091
    %v1098 = vadd.s32 %v1090, %v1096
    %vm1099 = vc.u32 %v1097, %v1093
    %v1100 = vsel %vm1099, 1, 0
    %v1101 = vadd.s32 %v1097, %v1093
    %v1102 = vadd.s32 %v1098, %v1100
    %v1103 = vadd.s32 %v1102, %v1092
    %v1104 = vadd.s32 %v1103, %v1094
    %v1105 = vand.u32 %v1082, 65535
    %v1106 = vshrl.u32 %v1082, 16
    %v1107 = vand.u32 %v1077, 65535
    %v1108 = vshrl.u32 %v1077, 16
    %v1109 = vmul.u32 %v1105, %v1107
    %v1110 = vmul.u32 %v1105, %v1108
    %v1111 = vmul.u32 %v1106, %v1107
    %v1112 = vmul.u32 %v1106, %v1108
    %v1113 = vshll.u32 %v1110, 16
    %v1114 = vshrl.u32 %v1110, 16
    %v1115 = vshll.u32 %v1111, 16
    %v1116 = vshrl.u32 %v1111, 16
    %vm1117 = vc.u32 %v1109, %v1113
    %v1118 = vsel %vm1117, 1, 0
    %v1119 = vadd.s32 %v1109, %v1113
    %v1120 = vadd.s32 %v1112, %v1118
    %vm1121 = vc.u32 %v1119, %v1115
    %v1122 = vsel %vm1121, 1, 0
    %v1123 = vadd.s32 %v1119, %v1115
    %v1124 = vadd.s32 %v1120, %v1122
    %v1125 = vadd.s32 %v1124, %v1114
    %v1126 = vadd.s32 %v1125, %v1116
    %v1127 = vmul.u32 %v1082, %v1073
    %v1128 = vadd.s32 %v1104, %v1123
    %vm1129 = vc.u32 %v1104, %v1123
    %v1130 = vadd.s32 %v1126, 1
    %v1131 = vsel %vm1129, %v1130, %v1126
    %v1132 = vadd.s32 %v1127, %v1131
    %v1133 = vadd.s32 %v1132, 536870912
    %v1134 = vshrl.u32 %v1133, 30
    %v1135 = vshll.u32 %v1134, 30
    %v1136 = vsub.s32 %v1132, %v1135
    %vm1137 = vcmp.lt.s32.totalorder %v1136, 0
    %v1138 = vsub.s32 0, %v1136
    %v1139 = vsel %vm1137, %v1138, %v1136
    %v1140 = vclz %v1139
    %v1141 = vsub.s32 %v1140, 2
    %vm1142 = vcmp.gt.s32.totalorder 0, %v1141
    %v1143 = vsel %vm1142, 0, %v1141
    %v1144 = vsub.s32 32, %v1143
    %v1145 = vshll.u32 %v1136, %v1143
    %v1146 = vshrl.u32 %v1128, %v1144
    %v1147 = vor.u32 %v1145, %v1146
    %v1148 = vsub.s32 4294967266, %v1143
    %v1149 = vadd.s32 %v1148, 127
    %v1150 = vshll.u32 %v1149, 23
    %v1151 = vor.u32 4788187, %v1150
    %v1152 = vand.u32 2147483647, %v1151
    %v1154 = vcvt.s32.f32 %v1147
    %v1155 = vmul.f32 %v1154, %v1152
    %v1156 = vxor.u32 %v1155, 2147483648
    %v1157 = vsel %vm1036, %v1156, %v1155
    %v1158 = vsub.s32 4, %v1134
    %v1159 = vsel %vm1036, %v1158, %v1134
    %v1160 = vsel %vm1035, %v879, %v1157
    %v1161 = vsel %vm1035, 0, %v1159
    %v1162 = vmul.f32 %v1160, %v1160
    %v1163 = vmul.f32 %v1162, -0.001358992
    %v1164 = vadd.f32 %v1163, 0.041655596
    %v1165 = vmul.f32 %v1162, %v1164
    %v1166 = vadd.f32 %v1165, -0.4999988
    %v1167 = vmul.f32 %v1162, %v1166
    %v1168 = vadd.f32 1.0, %v1167
    %v1169 = vmul.f32 %v1160, %v1160
    %v1170 = vmul.f32 %v1169, -0.00019511016
    %v1171 = vadd.f32 %v1170, 0.008332121
    %v1172 = vmul.f32 %v1169, %v1171
    %v1173 = vadd.f32 %v1172, -0.16666654
    %v1174 = vmul.f32 %v1169, %v1173
    %v1175 = vadd.f32 %v1174, 1.0
    %v1176 = vmul.f32 %v1175, %v1160
    %vm1177 = vweird.f32 %v879
    %v1178 = vadd.s32 %v1161, 3
    %v1179 = vand.u32 %v1178, 3
    %vm1180 = vcmp.lt.s32.totalorder %v1179, 2
    %vm1181 = vcmp.eq.s32.totalorder %v1179, 0
    %v1182 = vxor.u32 %v1176, 2147483648
    %v1183 = vsel %vm1181, %v1168, %v1182
    %vm1184 = vcmp.eq.s32.totalorder %v1179, 2
    %v1185 = vxor.u32 %v1168, 2147483648
    %v1186 = vsel %vm1184, %v1185, %v1176
    %v1187 = vsel %vm1180, %v1183, %v1186
    %v1188 = vsel %vm1177, nan, %v1187
    %s1189 = sld [smem:[#allocation3 + $0x100]]
    %s1190 = sld [smem:[#allocation3 + $0x101]]
    %s1191 = sld [smem:[#allocation3 + $0x102]]
    %s1192 = sld [smem:[#allocation3 + $0x103]]
    %s1193 = sld [smem:[#allocation3 + $0x104]]
    %s1194 = sld [smem:[#allocation3 + $0x105]]
    %s1195 = sld [smem:[#allocation3 + $0x106]]
    %v1196 = vstv %s1189
    %v1197 = vmul.f32 %v1033, %v1196
    %v1198 = vstv %s1190
    %v1199 = vmul.f32 %v1033, %v1198
    %v1200 = vstv %s1193
    %v1201 = vmul.f32 %v1188, %v1200
    %v1202 = vsub.f32 %v1199, %v1201
    %v1203 = vstv %s1191
    %v1204 = vmul.f32 %v1033, %v1203
    %v1205 = vstv %s1194
    %v1206 = vmul.f32 %v1188, %v1205
    %v1207 = vsub.f32 %v1204, %v1206
    %v1208 = vstv %s1192
    %v1209 = vmul.f32 %v1033, %v1208
    %v1210 = vstv %s1195
    %v1211 = vmul.f32 %v1188, %v1210
    %v1212 = vsub.f32 %v1209, %v1211
    %v1213 = vmul.f32 %v1188, %v1196
    %v1214 = vmul.f32 %v1188, %v1198
    %v1215 = vmul.f32 %v1033, %v1200
    %v1216 = vadd.f32 %v1214, %v1215
    %v1217 = vmul.f32 %v1188, %v1203
    %v1218 = vmul.f32 %v1033, %v1205
    %v1219 = vadd.f32 %v1217, %v1218
    %v1220 = vmul.f32 %v1188, %v1208
    %v1221 = vmul.f32 %v1033, %v1210
    %v1222 = vadd.f32 %v1220, %v1221
    %s1223 = sld [smem:[#allocation3 + $0x107]]
    %s1224 = sld [smem:[#allocation3 + $0x108]]
    %s1225 = sld [smem:[#allocation3 + $0x109]]
    %s1226 = sld [smem:[#allocation3 + $0x10a]]
    %v1227 = vmul.f32 %v784, %v1197
    %v1228 = vmul.f32 %v790, %v1213
    %v1229 = vadd.f32 %v1227, %v1228
    %v1230 = vstv %s1223
    %v1231 = vmul.f32 %v796, %v1230
    %v1232 = vadd.f32 %v1229, %v1231
    %v1233 = vmul.f32 %v784, %v1202
    %v1234 = vmul.f32 %v790, %v1216
    %v1235 = vadd.f32 %v1233, %v1234
    %v1236 = vstv %s1224
    %v1237 = vmul.f32 %v796, %v1236
    %v1238 = vadd.f32 %v1235, %v1237
    %v1239 = vmul.f32 %v784, %v1207
    %v1240 = vmul.f32 %v790, %v1219
    %v1241 = vadd.f32 %v1239, %v1240
    %v1242 = vstv %s1225
    %v1243 = vmul.f32 %v796, %v1242
    %v1244 = vadd.f32 %v1241, %v1243
    %v1245 = vmul.f32 %v784, %v1212
    %v1246 = vmul.f32 %v790, %v1222
    %v1247 = vadd.f32 %v1245, %v1246
    %v1248 = vstv %s1226
    %v1249 = vmul.f32 %v796, %v1248
    %v1250 = vadd.f32 %v1247, %v1249
    %v1251 = vadd.f32 %v1250, %v803
    %v1252 = vmul.f32 %v808, %v1197
    %v1253 = vmul.f32 %v813, %v1213
    %v1254 = vadd.f32 %v1252, %v1253
    %v1255 = vmul.f32 %v818, %v1230
    %v1256 = vadd.f32 %v1254, %v1255
    %v1257 = vmul.f32 %v808, %v1202
    %v1258 = vmul.f32 %v813, %v1216
    %v1259 = vadd.f32 %v1257, %v1258
    %v1260 = vmul.f32 %v818, %v1236
    %v1261 = vadd.f32 %v1259, %v1260
    %v1262 = vmul.f32 %v808, %v1207
    %v1263 = vmul.f32 %v813, %v1219
    %v1264 = vadd.f32 %v1262, %v1263
    %v1265 = vmul.f32 %v818, %v1242
    %v1266 = vadd.f32 %v1264, %v1265
    %v1267 = vmul.f32 %v808, %v1212
    %v1268 = vmul.f32 %v813, %v1222
    %v1269 = vadd.f32 %v1267, %v1268
    %v1270 = vmul.f32 %v818, %v1248
    %v1271 = vadd.f32 %v1269, %v1270
    %v1272 = vadd.f32 %v1271, %v824
    %v1273 = vmul.f32 %v830, %v1197
    %v1274 = vmul.f32 %v836, %v1213
    %v1275 = vadd.f32 %v1273, %v1274
    %v1276 = vmul.f32 %v842, %v1230
    %v1277 = vadd.f32 %v1275, %v1276
    %v1278 = vmul.f32 %v830, %v1202
    %v1279 = vmul.f32 %v836, %v1216
    %v1280 = vadd.f32 %v1278, %v1279
    %v1281 = vmul.f32 %v842, %v1236
    %v1282 = vadd.f32 %v1280, %v1281
    %v1283 = vmul.f32 %v830, %v1207
    %v1284 = vmul.f32 %v836, %v1219
    %v1285 = vadd.f32 %v1283, %v1284
    %v1286 = vmul.f32 %v842, %v1242
    %v1287 = vadd.f32 %v1285, %v1286
    %v1288 = vmul.f32 %v830, %v1212
    %v1289 = vmul.f32 %v836, %v1222
    %v1290 = vadd.f32 %v1288, %v1289
    %v1291 = vmul.f32 %v842, %v1248
    %v1292 = vadd.f32 %v1290, %v1291
    %v1293 = vadd.f32 %v1292, %v849
    %s1294 = scalar_lea.vmem [#allocation8], 192
    %1295 = vst [vmem:[%s1294] sm:$0xff] %v1232
    %s1296 = scalar_lea.vmem [#allocation8], 200
    %1297 = vst [vmem:[%s1296] sm:$0xff] %v1238
    %s1298 = scalar_lea.vmem [#allocation8], 208
    %1299 = vst [vmem:[%s1298] sm:$0xff] %v1244
    %s1300 = scalar_lea.vmem [#allocation8], 216
    %1301 = vst [vmem:[%s1300] sm:$0xff] %v1251
    %s1302 = scalar_lea.vmem [#allocation8], 224
    %1303 = vst [vmem:[%s1302] sm:$0xff] %v1256
    %s1304 = scalar_lea.vmem [#allocation8], 232
    %1305 = vst [vmem:[%s1304] sm:$0xff] %v1261
    %s1306 = scalar_lea.vmem [#allocation8], 240
    %1307 = vst [vmem:[%s1306] sm:$0xff] %v1266
    %s1308 = scalar_lea.vmem [#allocation8], 248
    %1309 = vst [vmem:[%s1308] sm:$0xff] %v1272
    %s1310 = scalar_lea.vmem [#allocation8], 256
    %1311 = vst [vmem:[%s1310] sm:$0xff] %v1277
    %s1312 = scalar_lea.vmem [#allocation8], 264
    %1313 = vst [vmem:[%s1312] sm:$0xff] %v1282
    %s1314 = scalar_lea.vmem [#allocation8], 272
    %1315 = vst [vmem:[%s1314] sm:$0xff] %v1287
    %s1316 = scalar_lea.vmem [#allocation8], 280
    %1317 = vst [vmem:[%s1316] sm:$0xff] %v1293
    %s1318 = scalar_lea.vmem [#allocation7], 24
    %v1319 = vld [vmem:[%s1318] sm:$0xff]
    %v1320 = vmul.f32 %v1319, %v47
    %s1321 = scalar_lea.vmem [#allocation7], 56
    %v1322 = vld [vmem:[%s1321] sm:$0xff]
    %v1323 = vadd.f32 %v1320, %v1322
    %v1324 = vand.u32 2147483647, %v1323
    %vm1325 = vcmp.le.f32.partialorder %v1324, 0.7853982
    %vm1326 = vcmp.lt.s32.totalorder %v1323, 0
    %v1327 = vand.u32 %v1323, 2139095040
    %v1328 = vshrl.u32 %v1327, 23
    %v1329 = vsub.s32 %v1328, 127
    %v1330 = vand.u32 2147483647, %v1323
    %v1331 = vand.u32 %v1330, 8388607
    %v1332 = vor.u32 %v1331, 8388608
    %v1333 = vsub.s32 0, %v1332
    %v1334 = vadd.s32 %v1329, 1
    %vm1335 = vcmp.gt.s32.totalorder %v1334, 0
    %v1336 = vsel %vm1335, %v1334, 0
    %v1337 = vshrl.u32 %v1336, 5
    %v1338 = vand.u32 %v1336, 31
    %v1339 = vsub.s32 32, %v1338
    %v1340 = vshrl.u32 683565275, %v1339
    %v1341 = vshll.u32 683565275, %v1338
    %v1342 = vshrl.u32 2475754826, %v1339
    %v1343 = vor.u32 %v1341, %v1342
    %v1344 = vshll.u32 2475754826, %v1338
    %v1345 = vshrl.u32 2131351028, %v1339
    %v1346 = vor.u32 %v1344, %v1345
    %v1347 = vshll.u32 2131351028, %v1338
    %v1348 = vshrl.u32 2102212464, %v1339
    %v1349 = vor.u32 %v1347, %v1348
    %v1350 = vshll.u32 2102212464, %v1338
    %v1351 = vshrl.u32 920167782, %v1339
    %v1352 = vor.u32 %v1350, %v1351
    %v1353 = vshll.u32 920167782, %v1338
    %v1354 = vshrl.u32 1326507024, %v1339
    %v1355 = vor.u32 %v1353, %v1354
    %vm1356 = vcmp.lt.s32.totalorder %v1337, 1
    %vm1357 = vcmp.lt.s32.totalorder %v1337, 2
    %vm1358 = vcmp.lt.s32.totalorder %v1337, 3
    %vm1359 = vcmp.lt.s32.totalorder %v1337, 4
    %v1360 = vsel %vm1356, %v1340, %v1343
    %v1361 = vsel %vm1359, %v1349, 2102212464
    %v1362 = vsel %vm1358, %v1346, %v1361
    %v1363 = vsel %vm1357, %v1360, %v1362
    %v1364 = vsel %vm1356, %v1343, %v1346
    %v1365 = vsel %vm1359, %v1352, 920167782
    %v1366 = vsel %vm1358, %v1349, %v1365
    %v1367 = vsel %vm1357, %v1364, %v1366
    %v1368 = vsel %vm1356, %v1346, %v1349
    %v1369 = vsel %vm1359, %v1355, 1326507024
    %v1370 = vsel %vm1358, %v1352, %v1369
    %v1371 = vsel %vm1357, %v1368, %v1370
    %v1372 = vshll.u32 %v1332, 8
    %v1373 = vand.u32 %v1372, 65535
    %v1374 = vshrl.u32 %v1372, 16
    %v1375 = vand.u32 %v1371, 65535
    %v1376 = vshrl.u32 %v1371, 16
    %v1377 = vmul.u32 %v1373, %v1375
    %v1378 = vmul.u32 %v1373, %v1376
    %v1379 = vmul.u32 %v1374, %v1375
    %v1380 = vmul.u32 %v1374, %v1376
    %v1381 = vshll.u32 %v1378, 16
    %v1382 = vshrl.u32 %v1378, 16
    %v1383 = vshll.u32 %v1379, 16
    %v1384 = vshrl.u32 %v1379, 16
    %vm1385 = vc.u32 %v1377, %v1381
    %v1386 = vsel %vm1385, 1, 0
    %v1387 = vadd.s32 %v1377, %v1381
    %v1388 = vadd.s32 %v1380, %v1386
    %vm1389 = vc.u32 %v1387, %v1383
    %v1390 = vsel %vm1389, 1, 0
    %v1391 = vadd.s32 %v1387, %v1383
    %v1392 = vadd.s32 %v1388, %v1390
    %v1393 = vadd.s32 %v1392, %v1382
    %v1394 = vadd.s32 %v1393, %v1384
    %v1395 = vand.u32 %v1372, 65535
    %v1396 = vshrl.u32 %v1372, 16
    %v1397 = vand.u32 %v1367, 65535
    %v1398 = vshrl.u32 %v1367, 16
    %v1399 = vmul.u32 %v1395, %v1397
    %v1400 = vmul.u32 %v1395, %v1398
    %v1401 = vmul.u32 %v1396, %v1397
    %v1402 = vmul.u32 %v1396, %v1398
    %v1403 = vshll.u32 %v1400, 16
    %v1404 = vshrl.u32 %v1400, 16
    %v1405 = vshll.u32 %v1401, 16
    %v1406 = vshrl.u32 %v1401, 16
    %vm1407 = vc.u32 %v1399, %v1403
    %v1408 = vsel %vm1407, 1, 0
    %v1409 = vadd.s32 %v1399, %v1403
    %v1410 = vadd.s32 %v1402, %v1408
    %vm1411 = vc.u32 %v1409, %v1405
    %v1412 = vsel %vm1411, 1, 0
    %v1413 = vadd.s32 %v1409, %v1405
    %v1414 = vadd.s32 %v1410, %v1412
    %v1415 = vadd.s32 %v1414, %v1404
    %v1416 = vadd.s32 %v1415, %v1406
    %v1417 = vmul.u32 %v1372, %v1363
    %v1418 = vadd.s32 %v1394, %v1413
    %vm1419 = vc.u32 %v1394, %v1413
    %v1420 = vadd.s32 %v1416, 1
    %v1421 = vsel %vm1419, %v1420, %v1416
    %v1422 = vadd.s32 %v1417, %v1421
    %v1423 = vadd.s32 %v1422, 536870912
    %v1424 = vshrl.u32 %v1423, 30
    %v1425 = vshll.u32 %v1424, 30
    %v1426 = vsub.s32 %v1422, %v1425
    %vm1427 = vcmp.lt.s32.totalorder %v1426, 0
    %v1428 = vsub.s32 0, %v1426
    %v1429 = vsel %vm1427, %v1428, %v1426
    %v1430 = vclz %v1429
    %v1431 = vsub.s32 %v1430, 2
    %vm1432 = vcmp.gt.s32.totalorder 0, %v1431
    %v1433 = vsel %vm1432, 0, %v1431
    %v1434 = vsub.s32 32, %v1433
    %v1435 = vshll.u32 %v1426, %v1433
    %v1436 = vshrl.u32 %v1418, %v1434
    %v1437 = vor.u32 %v1435, %v1436
    %v1438 = vsub.s32 4294967266, %v1433
    %v1439 = vadd.s32 %v1438, 127
    %v1440 = vshll.u32 %v1439, 23
    %v1441 = vor.u32 4788187, %v1440
    %v1442 = vand.u32 2147483647, %v1441
    %v1444 = vcvt.s32.f32 %v1437
    %v1445 = vmul.f32 %v1444, %v1442
    %v1446 = vxor.u32 %v1445, 2147483648
    %v1447 = vsel %vm1326, %v1446, %v1445
    %v1448 = vsub.s32 4, %v1424
    %v1449 = vsel %vm1326, %v1448, %v1424
    %v1450 = vsel %vm1325, %v1323, %v1447
    %v1451 = vsel %vm1325, 0, %v1449
    %v1452 = vmul.f32 %v1450, %v1450
    %v1453 = vmul.f32 %v1452, -0.001358992
    %v1454 = vadd.f32 %v1453, 0.041655596
    %v1455 = vmul.f32 %v1452, %v1454
    %v1456 = vadd.f32 %v1455, -0.4999988
    %v1457 = vmul.f32 %v1452, %v1456
    %v1458 = vadd.f32 1.0, %v1457
    %v1459 = vmul.f32 %v1450, %v1450
    %v1460 = vmul.f32 %v1459, -0.00019511016
    %v1461 = vadd.f32 %v1460, 0.008332121
    %v1462 = vmul.f32 %v1459, %v1461
    %v1463 = vadd.f32 %v1462, -0.16666654
    %v1464 = vmul.f32 %v1459, %v1463
    %v1465 = vadd.f32 %v1464, 1.0
    %v1466 = vmul.f32 %v1465, %v1450
    %vm1467 = vweird.f32 %v1323
    %v1468 = vand.u32 %v1451, 3
    %vm1469 = vcmp.lt.s32.totalorder %v1468, 2
    %vm1470 = vcmp.eq.s32.totalorder %v1468, 0
    %v1471 = vxor.u32 %v1466, 2147483648
    %v1472 = vsel %vm1470, %v1458, %v1471
    %vm1473 = vcmp.eq.s32.totalorder %v1468, 2
    %v1474 = vxor.u32 %v1458, 2147483648
    %v1475 = vsel %vm1473, %v1474, %v1466
    %v1476 = vsel %vm1469, %v1472, %v1475
    %v1477 = vsel %vm1467, nan, %v1476
    %v1478 = vand.u32 2147483647, %v1323
    %vm1479 = vcmp.le.f32.partialorder %v1478, 0.7853982
    %vm1480 = vcmp.lt.s32.totalorder %v1323, 0
    %v1481 = vand.u32 %v1323, 2139095040
    %v1482 = vshrl.u32 %v1481, 23
    %v1483 = vsub.s32 %v1482, 127
    %v1484 = vand.u32 2147483647, %v1323
    %v1485 = vand.u32 %v1484, 8388607
    %v1486 = vor.u32 %v1485, 8388608
    %v1487 = vsub.s32 0, %v1486
    %v1488 = vadd.s32 %v1483, 1
    %vm1489 = vcmp.gt.s32.totalorder %v1488, 0
    %v1490 = vsel %vm1489, %v1488, 0
    %v1491 = vshrl.u32 %v1490, 5
    %v1492 = vand.u32 %v1490, 31
    %v1493 = vsub.s32 32, %v1492
    %v1494 = vshrl.u32 683565275, %v1493
    %v1495 = vshll.u32 683565275, %v1492
    %v1496 = vshrl.u32 2475754826, %v1493
    %v1497 = vor.u32 %v1495, %v1496
    %v1498 = vshll.u32 2475754826, %v1492
    %v1499 = vshrl.u32 2131351028, %v1493
    %v1500 = vor.u32 %v1498, %v1499
    %v1501 = vshll.u32 2131351028, %v1492
    %v1502 = vshrl.u32 2102212464, %v1493
    %v1503 = vor.u32 %v1501, %v1502
    %v1504 = vshll.u32 2102212464, %v1492
    %v1505 = vshrl.u32 920167782, %v1493
    %v1506 = vor.u32 %v1504, %v1505
    %v1507 = vshll.u32 920167782, %v1492
    %v1508 = vshrl.u32 1326507024, %v1493
    %v1509 = vor.u32 %v1507, %v1508
    %vm1510 = vcmp.lt.s32.totalorder %v1491, 1
    %vm1511 = vcmp.lt.s32.totalorder %v1491, 2
    %vm1512 = vcmp.lt.s32.totalorder %v1491, 3
    %vm1513 = vcmp.lt.s32.totalorder %v1491, 4
    %v1514 = vsel %vm1510, %v1494, %v1497
    %v1515 = vsel %vm1513, %v1503, 2102212464
    %v1516 = vsel %vm1512, %v1500, %v1515
    %v1517 = vsel %vm1511, %v1514, %v1516
    %v1518 = vsel %vm1510, %v1497, %v1500
    %v1519 = vsel %vm1513, %v1506, 920167782
    %v1520 = vsel %vm1512, %v1503, %v1519
    %v1521 = vsel %vm1511, %v1518, %v1520
    %v1522 = vsel %vm1510, %v1500, %v1503
    %v1523 = vsel %vm1513, %v1509, 1326507024
    %v1524 = vsel %vm1512, %v1506, %v1523
    %v1525 = vsel %vm1511, %v1522, %v1524
    %v1526 = vshll.u32 %v1486, 8
    %v1527 = vand.u32 %v1526, 65535
    %v1528 = vshrl.u32 %v1526, 16
    %v1529 = vand.u32 %v1525, 65535
    %v1530 = vshrl.u32 %v1525, 16
    %v1531 = vmul.u32 %v1527, %v1529
    %v1532 = vmul.u32 %v1527, %v1530
    %v1533 = vmul.u32 %v1528, %v1529
    %v1534 = vmul.u32 %v1528, %v1530
    %v1535 = vshll.u32 %v1532, 16
    %v1536 = vshrl.u32 %v1532, 16
    %v1537 = vshll.u32 %v1533, 16
    %v1538 = vshrl.u32 %v1533, 16
    %vm1539 = vc.u32 %v1531, %v1535
    %v1540 = vsel %vm1539, 1, 0
    %v1541 = vadd.s32 %v1531, %v1535
    %v1542 = vadd.s32 %v1534, %v1540
    %vm1543 = vc.u32 %v1541, %v1537
    %v1544 = vsel %vm1543, 1, 0
    %v1545 = vadd.s32 %v1541, %v1537
    %v1546 = vadd.s32 %v1542, %v1544
    %v1547 = vadd.s32 %v1546, %v1536
    %v1548 = vadd.s32 %v1547, %v1538
    %v1549 = vand.u32 %v1526, 65535
    %v1550 = vshrl.u32 %v1526, 16
    %v1551 = vand.u32 %v1521, 65535
    %v1552 = vshrl.u32 %v1521, 16
    %v1553 = vmul.u32 %v1549, %v1551
    %v1554 = vmul.u32 %v1549, %v1552
    %v1555 = vmul.u32 %v1550, %v1551
    %v1556 = vmul.u32 %v1550, %v1552
    %v1557 = vshll.u32 %v1554, 16
    %v1558 = vshrl.u32 %v1554, 16
    %v1559 = vshll.u32 %v1555, 16
    %v1560 = vshrl.u32 %v1555, 16
    %vm1561 = vc.u32 %v1553, %v1557
    %v1562 = vsel %vm1561, 1, 0
    %v1563 = vadd.s32 %v1553, %v1557
    %v1564 = vadd.s32 %v1556, %v1562
    %vm1565 = vc.u32 %v1563, %v1559
    %v1566 = vsel %vm1565, 1, 0
    %v1567 = vadd.s32 %v1563, %v1559
    %v1568 = vadd.s32 %v1564, %v1566
    %v1569 = vadd.s32 %v1568, %v1558
    %v1570 = vadd.s32 %v1569, %v1560
    %v1571 = vmul.u32 %v1526, %v1517
    %v1572 = vadd.s32 %v1548, %v1567
    %vm1573 = vc.u32 %v1548, %v1567
    %v1574 = vadd.s32 %v1570, 1
    %v1575 = vsel %vm1573, %v1574, %v1570
    %v1576 = vadd.s32 %v1571, %v1575
    %v1577 = vadd.s32 %v1576, 536870912
    %v1578 = vshrl.u32 %v1577, 30
    %v1579 = vshll.u32 %v1578, 30
    %v1580 = vsub.s32 %v1576, %v1579
    %vm1581 = vcmp.lt.s32.totalorder %v1580, 0
    %v1582 = vsub.s32 0, %v1580
    %v1583 = vsel %vm1581, %v1582, %v1580
    %v1584 = vclz %v1583
    %v1585 = vsub.s32 %v1584, 2
    %vm1586 = vcmp.gt.s32.totalorder 0, %v1585
    %v1587 = vsel %vm1586, 0, %v1585
    %v1588 = vsub.s32 32, %v1587
    %v1589 = vshll.u32 %v1580, %v1587
    %v1590 = vshrl.u32 %v1572, %v1588
    %v1591 = vor.u32 %v1589, %v1590
    %v1592 = vsub.s32 4294967266, %v1587
    %v1593 = vadd.s32 %v1592, 127
    %v1594 = vshll.u32 %v1593, 23
    %v1595 = vor.u32 4788187, %v1594
    %v1596 = vand.u32 2147483647, %v1595
    %v1598 = vcvt.s32.f32 %v1591
    %v1599 = vmul.f32 %v1598, %v1596
    %v1600 = vxor.u32 %v1599, 2147483648
    %v1601 = vsel %vm1480, %v1600, %v1599
    %v1602 = vsub.s32 4, %v1578
    %v1603 = vsel %vm1480, %v1602, %v1578
    %v1604 = vsel %vm1479, %v1323, %v1601
    %v1605 = vsel %vm1479, 0, %v1603
    %v1606 = vmul.f32 %v1604, %v1604
    %v1607 = vmul.f32 %v1606, -0.001358992
    %v1608 = vadd.f32 %v1607, 0.041655596
    %v1609 = vmul.f32 %v1606, %v1608
    %v1610 = vadd.f32 %v1609, -0.4999988
    %v1611 = vmul.f32 %v1606, %v1610
    %v1612 = vadd.f32 1.0, %v1611
    %v1613 = vmul.f32 %v1604, %v1604
    %v1614 = vmul.f32 %v1613, -0.00019511016
    %v1615 = vadd.f32 %v1614, 0.008332121
    %v1616 = vmul.f32 %v1613, %v1615
    %v1617 = vadd.f32 %v1616, -0.16666654
    %v1618 = vmul.f32 %v1613, %v1617
    %v1619 = vadd.f32 %v1618, 1.0
    %v1620 = vmul.f32 %v1619, %v1604
    %vm1621 = vweird.f32 %v1323
    %v1622 = vadd.s32 %v1605, 3
    %v1623 = vand.u32 %v1622, 3
    %vm1624 = vcmp.lt.s32.totalorder %v1623, 2
    %vm1625 = vcmp.eq.s32.totalorder %v1623, 0
    %v1626 = vxor.u32 %v1620, 2147483648
    %v1627 = vsel %vm1625, %v1612, %v1626
    %vm1628 = vcmp.eq.s32.totalorder %v1623, 2
    %v1629 = vxor.u32 %v1612, 2147483648
    %v1630 = vsel %vm1628, %v1629, %v1620
    %v1631 = vsel %vm1624, %v1627, %v1630
    %v1632 = vsel %vm1621, nan, %v1631
    %s1633 = sld [smem:[#allocation3 + $0x180]]
    %s1634 = sld [smem:[#allocation3 + $0x181]]
    %s1635 = sld [smem:[#allocation3 + $0x182]]
    %s1636 = sld [smem:[#allocation3 + $0x183]]
    %s1637 = sld [smem:[#allocation3 + $0x184]]
    %s1638 = sld [smem:[#allocation3 + $0x185]]
    %s1639 = sld [smem:[#allocation3 + $0x186]]
    %v1640 = vstv %s1633
    %v1641 = vmul.f32 %v1477, %v1640
    %v1642 = vstv %s1634
    %v1643 = vmul.f32 %v1477, %v1642
    %v1644 = vstv %s1637
    %v1645 = vmul.f32 %v1632, %v1644
    %v1646 = vsub.f32 %v1643, %v1645
    %v1647 = vstv %s1635
    %v1648 = vmul.f32 %v1477, %v1647
    %v1649 = vstv %s1638
    %v1650 = vmul.f32 %v1632, %v1649
    %v1651 = vsub.f32 %v1648, %v1650
    %v1652 = vstv %s1636
    %v1653 = vmul.f32 %v1477, %v1652
    %v1654 = vstv %s1639
    %v1655 = vmul.f32 %v1632, %v1654
    %v1656 = vsub.f32 %v1653, %v1655
    %v1657 = vmul.f32 %v1632, %v1640
    %v1658 = vmul.f32 %v1632, %v1642
    %v1659 = vmul.f32 %v1477, %v1644
    %v1660 = vadd.f32 %v1658, %v1659
    %v1661 = vmul.f32 %v1632, %v1647
    %v1662 = vmul.f32 %v1477, %v1649
    %v1663 = vadd.f32 %v1661, %v1662
    %v1664 = vmul.f32 %v1632, %v1652
    %v1665 = vmul.f32 %v1477, %v1654
    %v1666 = vadd.f32 %v1664, %v1665
    %s1667 = sld [smem:[#allocation3 + $0x187]]
    %s1668 = sld [smem:[#allocation3 + $0x188]]
    %s1669 = sld [smem:[#allocation3 + $0x189]]
    %s1670 = sld [smem:[#allocation3 + $0x18a]]
    %v1671 = vmul.f32 %v1232, %v1641
    %v1672 = vmul.f32 %v1238, %v1657
    %v1673 = vadd.f32 %v1671, %v1672
    %v1674 = vstv %s1667
    %v1675 = vmul.f32 %v1244, %v1674
    %v1676 = vadd.f32 %v1673, %v1675
    %v1677 = vmul.f32 %v1232, %v1646
    %v1678 = vmul.f32 %v1238, %v1660
    %v1679 = vadd.f32 %v1677, %v1678
    %v1680 = vstv %s1668
    %v1681 = vmul.f32 %v1244, %v1680
    %v1682 = vadd.f32 %v1679, %v1681
    %v1683 = vmul.f32 %v1232, %v1651
    %v1684 = vmul.f32 %v1238, %v1663
    %v1685 = vadd.f32 %v1683, %v1684
    %v1686 = vstv %s1669
    %v1687 = vmul.f32 %v1244, %v1686
    %v1688 = vadd.f32 %v1685, %v1687
    %v1689 = vmul.f32 %v1232, %v1656
    %v1690 = vmul.f32 %v1238, %v1666
    %v1691 = vadd.f32 %v1689, %v1690
    %v1692 = vstv %s1670
    %v1693 = vmul.f32 %v1244, %v1692
    %v1694 = vadd.f32 %v1691, %v1693
    %v1695 = vadd.f32 %v1694, %v1251
    %v1696 = vmul.f32 %v1256, %v1641
    %v1697 = vmul.f32 %v1261, %v1657
    %v1698 = vadd.f32 %v1696, %v1697
    %v1699 = vmul.f32 %v1266, %v1674
    %v1700 = vadd.f32 %v1698, %v1699
    %v1701 = vmul.f32 %v1256, %v1646
    %v1702 = vmul.f32 %v1261, %v1660
    %v1703 = vadd.f32 %v1701, %v1702
    %v1704 = vmul.f32 %v1266, %v1680
    %v1705 = vadd.f32 %v1703, %v1704
    %v1706 = vmul.f32 %v1256, %v1651
    %v1707 = vmul.f32 %v1261, %v1663
    %v1708 = vadd.f32 %v1706, %v1707
    %v1709 = vmul.f32 %v1266, %v1686
    %v1710 = vadd.f32 %v1708, %v1709
    %v1711 = vmul.f32 %v1256, %v1656
    %v1712 = vmul.f32 %v1261, %v1666
    %v1713 = vadd.f32 %v1711, %v1712
    %v1714 = vmul.f32 %v1266, %v1692
    %v1715 = vadd.f32 %v1713, %v1714
    %v1716 = vadd.f32 %v1715, %v1272
    %v1717 = vmul.f32 %v1277, %v1641
    %v1718 = vmul.f32 %v1282, %v1657
    %v1719 = vadd.f32 %v1717, %v1718
    %v1720 = vmul.f32 %v1287, %v1674
    %v1721 = vadd.f32 %v1719, %v1720
    %v1722 = vmul.f32 %v1277, %v1646
    %v1723 = vmul.f32 %v1282, %v1660
    %v1724 = vadd.f32 %v1722, %v1723
    %v1725 = vmul.f32 %v1287, %v1680
    %v1726 = vadd.f32 %v1724, %v1725
    %v1727 = vmul.f32 %v1277, %v1651
    %v1728 = vmul.f32 %v1282, %v1663
    %v1729 = vadd.f32 %v1727, %v1728
    %v1730 = vmul.f32 %v1287, %v1686
    %v1731 = vadd.f32 %v1729, %v1730
    %v1732 = vmul.f32 %v1277, %v1656
    %v1733 = vmul.f32 %v1282, %v1666
    %v1734 = vadd.f32 %v1732, %v1733
    %v1735 = vmul.f32 %v1287, %v1692
    %v1736 = vadd.f32 %v1734, %v1735
    %v1737 = vadd.f32 %v1736, %v1293
    %s1738 = scalar_lea.vmem [#allocation8], 288
    %1739 = vst [vmem:[%s1738] sm:$0xff] %v1676
    %s1740 = scalar_lea.vmem [#allocation8], 296
    %1741 = vst [vmem:[%s1740] sm:$0xff] %v1682
    %s1742 = scalar_lea.vmem [#allocation8], 304
    %1743 = vst [vmem:[%s1742] sm:$0xff] %v1688
    %s1744 = scalar_lea.vmem [#allocation8], 312
    %1745 = vst [vmem:[%s1744] sm:$0xff] %v1695
    %s1746 = scalar_lea.vmem [#allocation8], 320
    %1747 = vst [vmem:[%s1746] sm:$0xff] %v1700
    %s1748 = scalar_lea.vmem [#allocation8], 328
    %1749 = vst [vmem:[%s1748] sm:$0xff] %v1705
    %s1750 = scalar_lea.vmem [#allocation8], 336
    %1751 = vst [vmem:[%s1750] sm:$0xff] %v1710
    %s1752 = scalar_lea.vmem [#allocation8], 344
    %1753 = vst [vmem:[%s1752] sm:$0xff] %v1716
    %s1754 = scalar_lea.vmem [#allocation8], 352
    %1755 = vst [vmem:[%s1754] sm:$0xff] %v1721
    %s1756 = scalar_lea.vmem [#allocation8], 360
    %1757 = vst [vmem:[%s1756] sm:$0xff] %v1726
    %s1758 = scalar_lea.vmem [#allocation8], 368
    %1759 = vst [vmem:[%s1758] sm:$0xff] %v1731
    %s1760 = scalar_lea.vmem [#allocation8], 376
    %1761 = vst [vmem:[%s1760] sm:$0xff] %v1737
    %s1762 = scalar_lea.vmem [#allocation8], 384
    %1763 = vst [vmem:[%s1762] sm:$0xff] %v1676
    %s1764 = scalar_lea.vmem [#allocation8], 392
    %1765 = vst [vmem:[%s1764] sm:$0xff] %v1682
    %s1766 = scalar_lea.vmem [#allocation8], 400
    %1767 = vst [vmem:[%s1766] sm:$0xff] %v1688
    %s1768 = scalar_lea.vmem [#allocation8], 408
    %1769 = vst [vmem:[%s1768] sm:$0xff] %v1695
    %s1770 = scalar_lea.vmem [#allocation8], 416
    %1771 = vst [vmem:[%s1770] sm:$0xff] %v1700
    %s1772 = scalar_lea.vmem [#allocation8], 424
    %1773 = vst [vmem:[%s1772] sm:$0xff] %v1705
    %s1774 = scalar_lea.vmem [#allocation8], 432
    %1775 = vst [vmem:[%s1774] sm:$0xff] %v1710
    %s1776 = scalar_lea.vmem [#allocation8], 440
    %1777 = vst [vmem:[%s1776] sm:$0xff] %v1716
    %s1778 = scalar_lea.vmem [#allocation8], 448
    %1779 = vst [vmem:[%s1778] sm:$0xff] %v1721
    %s1780 = scalar_lea.vmem [#allocation8], 456
    %1781 = vst [vmem:[%s1780] sm:$0xff] %v1726
    %s1782 = scalar_lea.vmem [#allocation8], 464
    %1783 = vst [vmem:[%s1782] sm:$0xff] %v1731
    %s1784 = scalar_lea.vmem [#allocation8], 472
    %1785 = vst [vmem:[%s1784] sm:$0xff] %v1737
    // Predicated region
    $region22: #{tpu_custom_call.1} parent=1 // pred_check
      _
    $region23: #{tpu_custom_call.1} parent=1 // pred_check_branch
      %1787 = sbr.rel (0) target = $region25
    $region24: #{tpu_custom_call.1} parent=1 // pred_region
      %1789 = vsyncadd [#allocation5], 0
      %s1790 = sshll.u32 [#allocation8], 4
      %s1791 = int_to_ptr.vmem [resolvable:$true] %s1790
      %s1792 = sshll.u32 %s3, 4
      %s1793 = int_to_ptr.hbm [resolvable:$true] %s1792
      %1798 = dma.vmem_to_hbm [thread:$0]  %s1791, 7680, %s1793, [#allocation5], 128, 128, 8
    $region25: #{tpu_custom_call.1} parent=1 // pred_fallthru
      _
    // Predicated region
    $region26: #{tpu_custom_call.1} parent=1 // pred_check
      _
    $region27: #{tpu_custom_call.1} parent=1 // pred_check_branch
      %1800 = sbr.rel (0) target = $region29
    $region28: #{tpu_custom_call.1} parent=1 // pred_region
      %1802 = dma.done [#allocation5], 7680
    $region29: #{tpu_custom_call.1} parent=1 // pred_fallthru
      _
    %1803 = vsyncpa [#allocation4], 1
    %1804 = vsyncpa [#allocation5], 1
    %1805 = vsyncpa [#allocation6], 1

</llo_original>
